<compile_context>
chip_gen: v7x
topology: tpu7x:2x2x1
jax: 0.10.0
libtpu: 0.0.40
codegen_flags: <defaults>
</compile_context>

<pallas_src>
import jax
import jax.numpy as jnp
from jax.experimental import pallas as pl
from jax.experimental.pallas import tpu as pltpu

EPS = 1e-5  # nn.InstanceNorm2d default eps, affine=False, biased variance


# ----------------------------------------------------------------------------
# Fully fused Scaled_Block kernel.  One grid step per batch item.
# Ref order: x, (mlp1 w,b)*depth, (mlp2 w,b)*depth,
#            mlp3 layer0 split (W3a, W3b, b3), (mlp3 w,b)*(depth-1),
#            last-layer (w,b), out.
# All weights are pre-transposed to (C_out, C_in); biases are (C_out, 1).
# ----------------------------------------------------------------------------
def _make_fused_kernel(depth, V):
    def kernel(*refs):
        o_ref = refs[-1]
        it = iter(refs[:-1])

        x_ref = next(it)
        x = x_ref[0].astype(jnp.float32)                      # (C_in, P)

        def run_mlp(h, n_layers):
            # relu after every layer except the last one of this sub-block
            for i in range(n_layers):
                wt = next(it)[...].astype(jnp.float32)        # (C_o, C_i)
                b = next(it)[...].astype(jnp.float32)         # (C_o, 1)
                h = jnp.dot(wt, h, preferred_element_type=jnp.float32) + b
                if i < n_layers - 1:
                    h = jnp.maximum(h, 0.0)
            return h

        def inst_norm(h):                                     # norm over P (lanes)
            mean = jnp.mean(h, axis=1, keepdims=True)
            var = jnp.mean(jnp.square(h - mean), axis=1, keepdims=True)
            return (h - mean) * jax.lax.rsqrt(var + EPS)

        # --- two parallel MLP routes (x is read from HBM once) -------------
        m1 = run_mlp(x, depth)                                # (C, P)
        m2 = run_mlp(x, depth)                                # (C, P)

        # --- per-channel spatial matmul: mult[c] = m1[c] @ m2[c], + gn_mult
        C, P = m1.shape
        m1r = m1.reshape(C, V, V)
        m2r = m2.reshape(C, V, V)
        mult = jax.lax.dot_general(
            m1r, m2r, (((2,), (1,)), ((0,), (0,))),
            preferred_element_type=jnp.float32)               # (C, V, V)
        mult = inst_norm(mult.reshape(C, P))                  # (C, P)

        # --- mlp3 layer 0 with split weights (replaces the channel concat) -
        w3a = next(it)[...].astype(jnp.float32)               # (C, C_in)
        w3b = next(it)[...].astype(jnp.float32)               # (C, C)
        b3 = next(it)[...].astype(jnp.float32)                # (C, 1)
        h = (jnp.dot(w3a, x, preferred_element_type=jnp.float32)
             + jnp.dot(w3b, mult, preferred_element_type=jnp.float32) + b3)
        if depth > 1:
            h = jnp.maximum(h, 0.0)
            h = run_mlp(h, depth - 1)                         # remaining mlp3 layers

        # --- last 1x1 conv (no activation) + gn_out -------------------------
        wl = next(it)[...].astype(jnp.float32)
        bl = next(it)[...].astype(jnp.float32)
        h = jnp.dot(wl, h, preferred_element_type=jnp.float32) + bl
        h = inst_norm(h)

        o_ref[0] = h.astype(o_ref.dtype)

    return kernel


# ----------------------------------------------------------------------------
# Scaled_Block forward wrapper.  Accepts / returns NCHW to match PyTorch.
# ----------------------------------------------------------------------------
def scaled_block_forward(x_nchw, params):
    N, C_in, V, _ = x_nchw.shape
    P = V * V
    C_out = params["mlp1_w"][-1].shape[1]
    depth = len(params["mlp1_w"])

    # NCHW -> (N, C, P): contiguous, free reshape (no HBM transpose).
    x = x_nchw.reshape(N, C_in, P)

    args = [x]
    in_specs = [pl.BlockSpec((1, C_in, P), lambda n: (n, 0, 0))]

    def add_layer(w, b):
        wt = w.T                                              # (C_out, C_in)
        b2 = b.reshape(-1, 1)                                 # (C_out, 1)
        args.extend([wt, b2])
        in_specs.append(pl.BlockSpec(wt.shape, lambda n: (0, 0)))
        in_specs.append(pl.BlockSpec(b2.shape, lambda n: (0, 0)))

    for w, b in zip(params["mlp1_w"], params["mlp1_b"]):
        add_layer(w, b)
    for w, b in zip(params["mlp2_w"], params["mlp2_b"]):
        add_layer(w, b)

    # mlp3 layer 0: split the (C_in + C_out, C_out) weight -> no concat needed.
    w3_0 = params["mlp3_w"][0]
    b3_0 = params["mlp3_b"][0].reshape(-1, 1)
    w3a_t = w3_0[:C_in].T                                     # (C_out, C_in)
    w3b_t = w3_0[C_in:].T                                     # (C_out, C_out)
    args.extend([w3a_t, w3b_t, b3_0])
    in_specs.extend([
        pl.BlockSpec(w3a_t.shape, lambda n: (0, 0)),
        pl.BlockSpec(w3b_t.shape, lambda n: (0, 0)),
        pl.BlockSpec(b3_0.shape, lambda n: (0, 0)),
    ])
    for w, b in zip(params["mlp3_w"][1:], params["mlp3_b"][1:]):
        add_layer(w, b)
    add_layer(params["last_w"], params["last_b"])

    out = pl.pallas_call(
        _make_fused_kernel(depth, V),
        grid=(N,),
        in_specs=in_specs,
        out_specs=pl.BlockSpec((1, C_out, P), lambda n: (n, 0, 0)),
        out_shape=jax.ShapeDtypeStruct((N, C_out, P), x_nchw.dtype),
        compiler_params=pltpu.CompilerParams(
            dimension_semantics=("parallel",)),   # megacore on v7x
    )(*args)

    return out.reshape(N, C_out, V, V)            # contiguous, free reshape


# ----------------------------------------------------------------------------
# Deterministic parameter init (xavier_uniform weights, zero biases).
# Weights stored as (C_in, C_out) like the original module's conv kernels.
# ----------------------------------------------------------------------------
def _init_mlp(key, c_in, c_out, depth):
    ws, bs = [], []
    ci = c_in
    for k in jax.random.split(key, depth):
        bound = (6.0 / (ci + c_out)) ** 0.5
        ws.append(jax.random.uniform(k, (ci, c_out), jnp.float32, -bound, bound))
        bs.append(jnp.zeros((c_out,), jnp.float32))
        ci = c_out
    return ws, bs


def init_params(key, c_in, c_out, depth):
    k1, k2, k3, k4 = jax.random.split(key, 4)
    p = {}
    p["mlp1_w"], p["mlp1_b"] = _init_mlp(k1, c_in, c_out, depth)
    p["mlp2_w"], p["mlp2_b"] = _init_mlp(k2, c_in, c_out, depth)
    p["mlp3_w"], p["mlp3_b"] = _init_mlp(k3, c_in + c_out, c_out, depth)
    (lw,), (lb,) = _init_mlp(k4, c_out, c_out, 1)
    p["last_w"], p["last_b"] = lw, lb
    return p


# ----------------------------------------------------------------------------
# Pure-JAX reference (NCHW) for correctness checking.
# ----------------------------------------------------------------------------
def _ref_forward(x_nchw, params):
    hi = jax.lax.Precision.HIGHEST

    def mlp(x, ws, bs):
        out = x
        for i, (w, b) in enumerate(zip(ws, bs)):
            out = jnp.einsum("nchw,cd->ndhw", out, w, precision=hi) + b[None, :, None, None]
            if i < len(ws) - 1:
                out = jnp.maximum(out, 0.0)
        return out

    def inorm(x):
        mean = jnp.mean(x, axis=(2, 3), keepdims=True)
        var = jnp.mean(jnp.square(x - mean), axis=(2, 3), keepdims=True)
        return (x - mean) * jax.lax.rsqrt(var + EPS)

    m1 = mlp(x_nchw, params["mlp1_w"], params["mlp1_b"])
    m2 = mlp(x_nchw, params["mlp2_w"], params["mlp2_b"])
    mult = inorm(jnp.einsum("ncik,nckj->ncij", m1, m2, precision=hi))
    out = jnp.concatenate([x_nchw, mult], axis=1)
    out = mlp(out, params["mlp3_w"], params["mlp3_b"])
    out = mlp(out, [params["last_w"]], [params["last_b"]])
    return inorm(out)


if __name__ == "__main__":
    N, C_in, C_out, V, depth = 2, 4, 8, 16, 2

    key = jax.random.PRNGKey(0)
    kx, kp = jax.random.split(key)
    x = jax.random.normal(kx, (N, C_in, V, V), dtype=jnp.float32)  # N x in_depth x V x V
    params = init_params(kp, C_in, C_out, depth)

    fwd = jax.jit(scaled_block_forward)
    out = jax.block_until_ready(fwd(x, params))
    assert out.shape == (N, C_out, V, V)

    ref = _ref_forward(x, params)
    assert jnp.allclose(out, ref, atol=2e-3, rtol=2e-3), float(jnp.max(jnp.abs(out - ref)))

    print("KERNEL_OK")
</pallas_src>

<mosaic_0001>
module attributes {stable_mosaic.version = 11 : i64} {
  func.func @kernel(%arg0: i32, %arg1: memref<1x4x256xf32, #tpu.memory_space<vmem>>, %arg2: memref<8x4xf32, #tpu.memory_space<vmem>>, %arg3: memref<8x1xf32, #tpu.memory_space<vmem>>, %arg4: memref<8x8xf32, #tpu.memory_space<vmem>>, %arg5: memref<8x1xf32, #tpu.memory_space<vmem>>, %arg6: memref<8x4xf32, #tpu.memory_space<vmem>>, %arg7: memref<8x1xf32, #tpu.memory_space<vmem>>, %arg8: memref<8x8xf32, #tpu.memory_space<vmem>>, %arg9: memref<8x1xf32, #tpu.memory_space<vmem>>, %arg10: memref<8x4xf32, #tpu.memory_space<vmem>>, %arg11: memref<8x8xf32, #tpu.memory_space<vmem>>, %arg12: memref<8x1xf32, #tpu.memory_space<vmem>>, %arg13: memref<8x8xf32, #tpu.memory_space<vmem>>, %arg14: memref<8x1xf32, #tpu.memory_space<vmem>>, %arg15: memref<8x8xf32, #tpu.memory_space<vmem>>, %arg16: memref<8x1xf32, #tpu.memory_space<vmem>>, %arg17: memref<1x8x256xf32, #tpu.memory_space<vmem>>) attributes {dimension_semantics = [#tpu.dimension_semantics<parallel>], iteration_bounds = array<i64: 2>, scalar_prefetch = 0 : i64, scratch_operands = 0 : i64, tpu.core_type = #tpu.core_type<tc>, window_params = [{transform_indices = @transform_0, window_bounds = array<i64: 1, 4, 256>}, {pipeline_mode = #tpu.pipeline_mode<synchronous>, transform_indices = @transform_1, window_bounds = array<i64: 8, 4>}, {pipeline_mode = #tpu.pipeline_mode<synchronous>, transform_indices = @transform_2, window_bounds = array<i64: 8, 1>}, {pipeline_mode = #tpu.pipeline_mode<synchronous>, transform_indices = @transform_3, window_bounds = array<i64: 8, 8>}, {pipeline_mode = #tpu.pipeline_mode<synchronous>, transform_indices = @transform_4, window_bounds = array<i64: 8, 1>}, {pipeline_mode = #tpu.pipeline_mode<synchronous>, transform_indices = @transform_5, window_bounds = array<i64: 8, 4>}, {pipeline_mode = #tpu.pipeline_mode<synchronous>, transform_indices = @transform_6, window_bounds = array<i64: 8, 1>}, {pipeline_mode = #tpu.pipeline_mode<synchronous>, transform_indices = @transform_7, window_bounds = array<i64: 8, 8>}, {pipeline_mode = #tpu.pipeline_mode<synchronous>, transform_indices = @transform_8, window_bounds = array<i64: 8, 1>}, {pipeline_mode = #tpu.pipeline_mode<synchronous>, transform_indices = @transform_9, window_bounds = array<i64: 8, 4>}, {pipeline_mode = #tpu.pipeline_mode<synchronous>, transform_indices = @transform_10, window_bounds = array<i64: 8, 8>}, {pipeline_mode = #tpu.pipeline_mode<synchronous>, transform_indices = @transform_11, window_bounds = array<i64: 8, 1>}, {pipeline_mode = #tpu.pipeline_mode<synchronous>, transform_indices = @transform_12, window_bounds = array<i64: 8, 8>}, {pipeline_mode = #tpu.pipeline_mode<synchronous>, transform_indices = @transform_13, window_bounds = array<i64: 8, 1>}, {pipeline_mode = #tpu.pipeline_mode<synchronous>, transform_indices = @transform_14, window_bounds = array<i64: 8, 8>}, {pipeline_mode = #tpu.pipeline_mode<synchronous>, transform_indices = @transform_15, window_bounds = array<i64: 8, 1>}, {transform_indices = @transform_16, window_bounds = array<i64: 1, 8, 256>}]} {
    %c0 = arith.constant 0 : index
    %c0_0 = arith.constant 0 : index
    %c0_1 = arith.constant 0 : index
    %0 = vector.load %arg1[%c0, %c0_0, %c0_1] : memref<1x4x256xf32, #tpu.memory_space<vmem>>, vector<1x4x256xf32>
    %1 = vector.shape_cast %0 : vector<1x4x256xf32> to vector<4x256xf32>
    %c0_2 = arith.constant 0 : index
    %c0_3 = arith.constant 0 : index
    %2 = vector.load %arg2[%c0_2, %c0_3] : memref<8x4xf32, #tpu.memory_space<vmem>>, vector<8x4xf32>
    %c0_4 = arith.constant 0 : index
    %c0_5 = arith.constant 0 : index
    %3 = vector.load %arg3[%c0_4, %c0_5] : memref<8x1xf32, #tpu.memory_space<vmem>>, vector<8x1xf32>
    %cst = arith.constant dense<0.000000e+00> : vector<8x256xf32>
    %4 = tpu.matmul %2, %1, %cst {dimension_numbers = #tpu.dot_dimension_numbers<[1], [0], [0], [1], [0, 0, 1, 1], [], []>} : vector<8x4xf32>, vector<4x256xf32>, vector<8x256xf32> -> vector<8x256xf32>
    %5 = vector.broadcast %3 : vector<8x1xf32> to vector<8x256xf32>
    %6 = arith.addf %4, %5 : vector<8x256xf32>
    %cst_6 = arith.constant 0.000000e+00 : f32
    %7 = vector.broadcast %cst_6 : f32 to vector<8x256xf32>
    %8 = arith.maximumf %6, %7 : vector<8x256xf32>
    %c0_7 = arith.constant 0 : index
    %c0_8 = arith.constant 0 : index
    %9 = vector.load %arg4[%c0_7, %c0_8] : memref<8x8xf32, #tpu.memory_space<vmem>>, vector<8x8xf32>
    %c0_9 = arith.constant 0 : index
    %c0_10 = arith.constant 0 : index
    %10 = vector.load %arg5[%c0_9, %c0_10] : memref<8x1xf32, #tpu.memory_space<vmem>>, vector<8x1xf32>
    %cst_11 = arith.constant dense<0.000000e+00> : vector<8x256xf32>
    %11 = tpu.matmul %9, %8, %cst_11 {dimension_numbers = #tpu.dot_dimension_numbers<[1], [0], [0], [1], [0, 0, 1, 1], [], []>} : vector<8x8xf32>, vector<8x256xf32>, vector<8x256xf32> -> vector<8x256xf32>
    %12 = vector.broadcast %10 : vector<8x1xf32> to vector<8x256xf32>
    %13 = arith.addf %11, %12 : vector<8x256xf32>
    %c0_12 = arith.constant 0 : index
    %c0_13 = arith.constant 0 : index
    %14 = vector.load %arg6[%c0_12, %c0_13] : memref<8x4xf32, #tpu.memory_space<vmem>>, vector<8x4xf32>
    %c0_14 = arith.constant 0 : index
    %c0_15 = arith.constant 0 : index
    %15 = vector.load %arg7[%c0_14, %c0_15] : memref<8x1xf32, #tpu.memory_space<vmem>>, vector<8x1xf32>
    %cst_16 = arith.constant dense<0.000000e+00> : vector<8x256xf32>
    %16 = tpu.matmul %14, %1, %cst_16 {dimension_numbers = #tpu.dot_dimension_numbers<[1], [0], [0], [1], [0, 0, 1, 1], [], []>} : vector<8x4xf32>, vector<4x256xf32>, vector<8x256xf32> -> vector<8x256xf32>
    %17 = vector.broadcast %15 : vector<8x1xf32> to vector<8x256xf32>
    %18 = arith.addf %16, %17 : vector<8x256xf32>
    %cst_17 = arith.constant 0.000000e+00 : f32
    %19 = vector.broadcast %cst_17 : f32 to vector<8x256xf32>
    %20 = arith.maximumf %18, %19 : vector<8x256xf32>
    %c0_18 = arith.constant 0 : index
    %c0_19 = arith.constant 0 : index
    %21 = vector.load %arg8[%c0_18, %c0_19] : memref<8x8xf32, #tpu.memory_space<vmem>>, vector<8x8xf32>
    %c0_20 = arith.constant 0 : index
    %c0_21 = arith.constant 0 : index
    %22 = vector.load %arg9[%c0_20, %c0_21] : memref<8x1xf32, #tpu.memory_space<vmem>>, vector<8x1xf32>
    %cst_22 = arith.constant dense<0.000000e+00> : vector<8x256xf32>
    %23 = tpu.matmul %21, %20, %cst_22 {dimension_numbers = #tpu.dot_dimension_numbers<[1], [0], [0], [1], [0, 0, 1, 1], [], []>} : vector<8x8xf32>, vector<8x256xf32>, vector<8x256xf32> -> vector<8x256xf32>
    %24 = vector.broadcast %22 : vector<8x1xf32> to vector<8x256xf32>
    %25 = arith.addf %23, %24 : vector<8x256xf32>
    %26 = vector.shape_cast %13 : vector<8x256xf32> to vector<8x16x16xf32>
    %27 = vector.shape_cast %25 : vector<8x256xf32> to vector<8x16x16xf32>
    %cst_23 = arith.constant dense<0.000000e+00> : vector<8x16x16xf32>
    %28 = tpu.matmul %26, %27, %cst_23 {dimension_numbers = #tpu.dot_dimension_numbers<[2], [1], [1], [2], [0, 0, 0, 1, 1, 2], [0], [0]>} : vector<8x16x16xf32>, vector<8x16x16xf32>, vector<8x16x16xf32> -> vector<8x16x16xf32>
    %29 = vector.shape_cast %28 : vector<8x16x16xf32> to vector<8x256xf32>
    %cst_24 = arith.constant dense<0.000000e+00> : vector<8xf32>
    %30 = vector.multi_reduction <add>, %29, %cst_24 [1] : vector<8x256xf32> to vector<8xf32>
    %31 = vector.shape_cast %30 : vector<8xf32> to vector<8x1xf32>
    %cst_25 = arith.constant 2.560000e+02 : f32
    %32 = vector.broadcast %cst_25 : f32 to vector<8x1xf32>
    %33 = arith.divf %31, %32 : vector<8x1xf32>
    %34 = vector.broadcast %33 : vector<8x1xf32> to vector<8x256xf32>
    %35 = arith.subf %29, %34 : vector<8x256xf32>
    %36 = arith.mulf %35, %35 : vector<8x256xf32>
    %cst_26 = arith.constant dense<0.000000e+00> : vector<8xf32>
    %37 = vector.multi_reduction <add>, %36, %cst_26 [1] : vector<8x256xf32> to vector<8xf32>
    %38 = vector.shape_cast %37 : vector<8xf32> to vector<8x1xf32>
    %cst_27 = arith.constant 2.560000e+02 : f32
    %39 = vector.broadcast %cst_27 : f32 to vector<8x1xf32>
    %40 = arith.divf %38, %39 : vector<8x1xf32>
    %41 = vector.broadcast %33 : vector<8x1xf32> to vector<8x256xf32>
    %42 = arith.subf %29, %41 : vector<8x256xf32>
    %cst_28 = arith.constant 9.99999974E-6 : f32
    %43 = vector.broadcast %cst_28 : f32 to vector<8x1xf32>
    %44 = arith.addf %40, %43 : vector<8x1xf32>
    %45 = math.rsqrt %44 : vector<8x1xf32>
    %46 = vector.broadcast %45 : vector<8x1xf32> to vector<8x256xf32>
    %47 = arith.mulf %42, %46 : vector<8x256xf32>
    %c0_29 = arith.constant 0 : index
    %c0_30 = arith.constant 0 : index
    %48 = vector.load %arg10[%c0_29, %c0_30] : memref<8x4xf32, #tpu.memory_space<vmem>>, vector<8x4xf32>
    %c0_31 = arith.constant 0 : index
    %c0_32 = arith.constant 0 : index
    %49 = vector.load %arg11[%c0_31, %c0_32] : memref<8x8xf32, #tpu.memory_space<vmem>>, vector<8x8xf32>
    %c0_33 = arith.constant 0 : index
    %c0_34 = arith.constant 0 : index
    %50 = vector.load %arg12[%c0_33, %c0_34] : memref<8x1xf32, #tpu.memory_space<vmem>>, vector<8x1xf32>
    %cst_35 = arith.constant dense<0.000000e+00> : vector<8x256xf32>
    %51 = tpu.matmul %48, %1, %cst_35 {dimension_numbers = #tpu.dot_dimension_numbers<[1], [0], [0], [1], [0, 0, 1, 1], [], []>} : vector<8x4xf32>, vector<4x256xf32>, vector<8x256xf32> -> vector<8x256xf32>
    %cst_36 = arith.constant dense<0.000000e+00> : vector<8x256xf32>
    %52 = tpu.matmul %49, %47, %cst_36 {dimension_numbers = #tpu.dot_dimension_numbers<[1], [0], [0], [1], [0, 0, 1, 1], [], []>} : vector<8x8xf32>, vector<8x256xf32>, vector<8x256xf32> -> vector<8x256xf32>
    %53 = arith.addf %51, %52 : vector<8x256xf32>
    %54 = vector.broadcast %50 : vector<8x1xf32> to vector<8x256xf32>
    %55 = arith.addf %53, %54 : vector<8x256xf32>
    %cst_37 = arith.constant 0.000000e+00 : f32
    %56 = vector.broadcast %cst_37 : f32 to vector<8x256xf32>
    %57 = arith.maximumf %55, %56 : vector<8x256xf32>
    %c0_38 = arith.constant 0 : index
    %c0_39 = arith.constant 0 : index
    %58 = vector.load %arg13[%c0_38, %c0_39] : memref<8x8xf32, #tpu.memory_space<vmem>>, vector<8x8xf32>
    %c0_40 = arith.constant 0 : index
    %c0_41 = arith.constant 0 : index
    %59 = vector.load %arg14[%c0_40, %c0_41] : memref<8x1xf32, #tpu.memory_space<vmem>>, vector<8x1xf32>
    %cst_42 = arith.constant dense<0.000000e+00> : vector<8x256xf32>
    %60 = tpu.matmul %58, %57, %cst_42 {dimension_numbers = #tpu.dot_dimension_numbers<[1], [0], [0], [1], [0, 0, 1, 1], [], []>} : vector<8x8xf32>, vector<8x256xf32>, vector<8x256xf32> -> vector<8x256xf32>
    %61 = vector.broadcast %59 : vector<8x1xf32> to vector<8x256xf32>
    %62 = arith.addf %60, %61 : vector<8x256xf32>
    %c0_43 = arith.constant 0 : index
    %c0_44 = arith.constant 0 : index
    %63 = vector.load %arg15[%c0_43, %c0_44] : memref<8x8xf32, #tpu.memory_space<vmem>>, vector<8x8xf32>
    %c0_45 = arith.constant 0 : index
    %c0_46 = arith.constant 0 : index
    %64 = vector.load %arg16[%c0_45, %c0_46] : memref<8x1xf32, #tpu.memory_space<vmem>>, vector<8x1xf32>
    %cst_47 = arith.constant dense<0.000000e+00> : vector<8x256xf32>
    %65 = tpu.matmul %63, %62, %cst_47 {dimension_numbers = #tpu.dot_dimension_numbers<[1], [0], [0], [1], [0, 0, 1, 1], [], []>} : vector<8x8xf32>, vector<8x256xf32>, vector<8x256xf32> -> vector<8x256xf32>
    %66 = vector.broadcast %64 : vector<8x1xf32> to vector<8x256xf32>
    %67 = arith.addf %65, %66 : vector<8x256xf32>
    %cst_48 = arith.constant dense<0.000000e+00> : vector<8xf32>
    %68 = vector.multi_reduction <add>, %67, %cst_48 [1] : vector<8x256xf32> to vector<8xf32>
    %69 = vector.shape_cast %68 : vector<8xf32> to vector<8x1xf32>
    %cst_49 = arith.constant 2.560000e+02 : f32
    %70 = vector.broadcast %cst_49 : f32 to vector<8x1xf32>
    %71 = arith.divf %69, %70 : vector<8x1xf32>
    %72 = vector.broadcast %71 : vector<8x1xf32> to vector<8x256xf32>
    %73 = arith.subf %67, %72 : vector<8x256xf32>
    %74 = arith.mulf %73, %73 : vector<8x256xf32>
    %cst_50 = arith.constant dense<0.000000e+00> : vector<8xf32>
    %75 = vector.multi_reduction <add>, %74, %cst_50 [1] : vector<8x256xf32> to vector<8xf32>
    %76 = vector.shape_cast %75 : vector<8xf32> to vector<8x1xf32>
    %cst_51 = arith.constant 2.560000e+02 : f32
    %77 = vector.broadcast %cst_51 : f32 to vector<8x1xf32>
    %78 = arith.divf %76, %77 : vector<8x1xf32>
    %79 = vector.broadcast %71 : vector<8x1xf32> to vector<8x256xf32>
    %80 = arith.subf %67, %79 : vector<8x256xf32>
    %cst_52 = arith.constant 9.99999974E-6 : f32
    %81 = vector.broadcast %cst_52 : f32 to vector<8x1xf32>
    %82 = arith.addf %78, %81 : vector<8x1xf32>
    %83 = math.rsqrt %82 : vector<8x1xf32>
    %84 = vector.broadcast %83 : vector<8x1xf32> to vector<8x256xf32>
    %85 = arith.mulf %80, %84 : vector<8x256xf32>
    %c0_53 = arith.constant 0 : index
    %c0_54 = arith.constant 0 : index
    %c0_55 = arith.constant 0 : index
    %86 = vector.load %arg17[%c0_53, %c0_54, %c0_55] : memref<1x8x256xf32, #tpu.memory_space<vmem>>, vector<1x8x256xf32>
    %87 = vector.shape_cast %86 : vector<1x8x256xf32> to vector<8x256xf32>
    %88 = vector.shape_cast %85 : vector<8x256xf32> to vector<1x8x256xf32>
    tpu.vector_store %arg17[%c0_53, %c0_54, %c0_55], %88 {strides = array<i32>} : memref<1x8x256xf32, #tpu.memory_space<vmem>>, vector<1x8x256xf32>,
    return
  }
  func.func @transform_0(%arg0: i32) -> (i32, i32, i32) {
    %c0_i32 = arith.constant 0 : i32
    %c0_i32_0 = arith.constant 0 : i32
    %c0_i32_1 = arith.constant 0 : i32
    return %arg0, %c0_i32, %c0_i32_0 : i32, i32, i32
  }
  func.func @transform_1(%arg0: i32) -> (i32, i32) {
    %c0_i32 = arith.constant 0 : i32
    %c0_i32_0 = arith.constant 0 : i32
    %c0_i32_1 = arith.constant 0 : i32
    return %c0_i32, %c0_i32_0 : i32, i32
  }
  func.func @transform_2(%arg0: i32) -> (i32, i32) {
    %c0_i32 = arith.constant 0 : i32
    %c0_i32_0 = arith.constant 0 : i32
    %c0_i32_1 = arith.constant 0 : i32
    return %c0_i32, %c0_i32_0 : i32, i32
  }
  func.func @transform_3(%arg0: i32) -> (i32, i32) {
    %c0_i32 = arith.constant 0 : i32
    %c0_i32_0 = arith.constant 0 : i32
    %c0_i32_1 = arith.constant 0 : i32
    return %c0_i32, %c0_i32_0 : i32, i32
  }
  func.func @transform_4(%arg0: i32) -> (i32, i32) {
    %c0_i32 = arith.constant 0 : i32
    %c0_i32_0 = arith.constant 0 : i32
    %c0_i32_1 = arith.constant 0 : i32
    return %c0_i32, %c0_i32_0 : i32, i32
  }
  func.func @transform_5(%arg0: i32) -> (i32, i32) {
    %c0_i32 = arith.constant 0 : i32
    %c0_i32_0 = arith.constant 0 : i32
    %c0_i32_1 = arith.constant 0 : i32
    return %c0_i32, %c0_i32_0 : i32, i32
  }
  func.func @transform_6(%arg0: i32) -> (i32, i32) {
    %c0_i32 = arith.constant 0 : i32
    %c0_i32_0 = arith.constant 0 : i32
    %c0_i32_1 = arith.constant 0 : i32
    return %c0_i32, %c0_i32_0 : i32, i32
  }
  func.func @transform_7(%arg0: i32) -> (i32, i32) {
    %c0_i32 = arith.constant 0 : i32
    %c0_i32_0 = arith.constant 0 : i32
    %c0_i32_1 = arith.constant 0 : i32
    return %c0_i32, %c0_i32_0 : i32, i32
  }
  func.func @transform_8(%arg0: i32) -> (i32, i32) {
    %c0_i32 = arith.constant 0 : i32
    %c0_i32_0 = arith.constant 0 : i32
    %c0_i32_1 = arith.constant 0 : i32
    return %c0_i32, %c0_i32_0 : i32, i32
  }
  func.func @transform_9(%arg0: i32) -> (i32, i32) {
    %c0_i32 = arith.constant 0 : i32
    %c0_i32_0 = arith.constant 0 : i32
    %c0_i32_1 = arith.constant 0 : i32
    return %c0_i32, %c0_i32_0 : i32, i32
  }
  func.func @transform_10(%arg0: i32) -> (i32, i32) {
    %c0_i32 = arith.constant 0 : i32
    %c0_i32_0 = arith.constant 0 : i32
    %c0_i32_1 = arith.constant 0 : i32
    return %c0_i32, %c0_i32_0 : i32, i32
  }
  func.func @transform_11(%arg0: i32) -> (i32, i32) {
    %c0_i32 = arith.constant 0 : i32
    %c0_i32_0 = arith.constant 0 : i32
    %c0_i32_1 = arith.constant 0 : i32
    return %c0_i32, %c0_i32_0 : i32, i32
  }
  func.func @transform_12(%arg0: i32) -> (i32, i32) {
    %c0_i32 = arith.constant 0 : i32
    %c0_i32_0 = arith.constant 0 : i32
    %c0_i32_1 = arith.constant 0 : i32
    return %c0_i32, %c0_i32_0 : i32, i32
  }
  func.func @transform_13(%arg0: i32) -> (i32, i32) {
    %c0_i32 = arith.constant 0 : i32
    %c0_i32_0 = arith.constant 0 : i32
    %c0_i32_1 = arith.constant 0 : i32
    return %c0_i32, %c0_i32_0 : i32, i32
  }
  func.func @transform_14(%arg0: i32) -> (i32, i32) {
    %c0_i32 = arith.constant 0 : i32
    %c0_i32_0 = arith.constant 0 : i32
    %c0_i32_1 = arith.constant 0 : i32
    return %c0_i32, %c0_i32_0 : i32, i32
  }
  func.func @transform_15(%arg0: i32) -> (i32, i32) {
    %c0_i32 = arith.constant 0 : i32
    %c0_i32_0 = arith.constant 0 : i32
    %c0_i32_1 = arith.constant 0 : i32
    return %c0_i32, %c0_i32_0 : i32, i32
  }
  func.func @transform_16(%arg0: i32) -> (i32, i32, i32) {
    %c0_i32 = arith.constant 0 : i32
    %c0_i32_0 = arith.constant 0 : i32
    %c0_i32_1 = arith.constant 0 : i32
    return %arg0, %c0_i32, %c0_i32_0 : i32, i32, i32
  }
}

</mosaic_0001>

<llo_original>
// kernel: scaled_block_forward.1
$region0: #{scaled_block_forward.1}
  #allocation0 [shape = 'u32[]', space=smem, size = 0x4, offset = 0x4, fixed_abs, tag = 'smem constant byte address 0x4 - core index']
  #allocation1 [shape = 'u32[144,128]{1,0:T(1,128)}', space=vmem, size = 0x12000, scoped, tag = 'internal scratch']
  %s0 = inlined_call_operand.vmem [shape: f32[2,4,256], index: 0, kind: input, shape index: {}]
  %s1 = inlined_call_operand.vmem [shape: f32[8,4], index: 1, kind: input, shape index: {}]
  %s2 = inlined_call_operand.vmem [shape: f32[8,1], index: 2, kind: input, shape index: {}]
  %s3 = inlined_call_operand.vmem [shape: f32[8,8], index: 3, kind: input, shape index: {}]
  %s4 = inlined_call_operand.vmem [shape: f32[8,1], index: 4, kind: input, shape index: {}]
  %s5 = inlined_call_operand.vmem [shape: f32[8,4], index: 5, kind: input, shape index: {}]
  %s6 = inlined_call_operand.vmem [shape: f32[8,1], index: 6, kind: input, shape index: {}]
  %s7 = inlined_call_operand.vmem [shape: f32[8,8], index: 7, kind: input, shape index: {}]
  %s8 = inlined_call_operand.vmem [shape: f32[8,1], index: 8, kind: input, shape index: {}]
  %s9 = inlined_call_operand.vmem [shape: f32[8,4], index: 9, kind: input, shape index: {}]
  %s10 = inlined_call_operand.vmem [shape: f32[8,8], index: 10, kind: input, shape index: {}]
  %s11 = inlined_call_operand.vmem [shape: f32[8,1], index: 11, kind: input, shape index: {}]
  %s12 = inlined_call_operand.vmem [shape: f32[8,8], index: 12, kind: input, shape index: {}]
  %s13 = inlined_call_operand.vmem [shape: f32[8,1], index: 13, kind: input, shape index: {}]
  %s14 = inlined_call_operand.vmem [shape: f32[8,8], index: 14, kind: input, shape index: {}]
  %s15 = inlined_call_operand.vmem [shape: f32[8,1], index: 15, kind: input, shape index: {}]
  %s16 = inlined_call_operand.vmem [shape: f32[2,8,256], index: 16, kind: output, shape index: {}]
  %s17 = sld [smem:[#allocation0]]
  $region97: #{scaled_block_forward.1} parent=0
    _
  %s19 = ssub.s32 1, %s17
  %s20 = scalar_select 0, %s19, %s17
  loop: start=0, step=1, limit=4
  $region2: #{scaled_block_forward.1} parent=0 // loop_pre_header
    _
  $region3: #{scaled_block_forward.1} parent=0 // loop_header
    %s22 = sphi 0, %s26
    %p23 = scmp.ge.s32.totalorder %s22, 4
    %s32 = sphi 0, %s34
    %s35 = sphi 0, %s32
    %s36 = sphi 0, %s35
    %s52 = sphi 0, %s36
    %s56 = sphi 0, %s56
    %s58 = sphi 0, %s56
    %s59 = sphi 0, %s58
    %s73 = sphi 0, %s59
    %s77 = sphi 0, %s77
    %s79 = sphi 0, %s77
    %s80 = sphi 0, %s79
    %s94 = sphi 0, %s80
    %s98 = sphi 0, %s98
    %s100 = sphi 0, %s98
    %s101 = sphi 0, %s100
    %s115 = sphi 0, %s101
    %s119 = sphi 0, %s119
    %s121 = sphi 0, %s119
    %s122 = sphi 0, %s121
    %s136 = sphi 0, %s122
    %s140 = sphi 0, %s140
    %s142 = sphi 0, %s140
    %s143 = sphi 0, %s142
    %s157 = sphi 0, %s143
    %s161 = sphi 0, %s161
    %s163 = sphi 0, %s161
    %s164 = sphi 0, %s163
    %s178 = sphi 0, %s164
    %s182 = sphi 0, %s182
    %s184 = sphi 0, %s182
    %s185 = sphi 0, %s184
    %s199 = sphi 0, %s185
    %s203 = sphi 0, %s203
    %s205 = sphi 0, %s203
    %s206 = sphi 0, %s205
    %s220 = sphi 0, %s206
    %s224 = sphi 0, %s224
    %s226 = sphi 0, %s224
    %s227 = sphi 0, %s226
    %s241 = sphi 0, %s227
    %s245 = sphi 0, %s245
    %s247 = sphi 0, %s245
    %s248 = sphi 0, %s247
    %s262 = sphi 0, %s248
    %s266 = sphi 0, %s266
    %s268 = sphi 0, %s266
    %s269 = sphi 0, %s268
    %s283 = sphi 0, %s269
    %s287 = sphi 0, %s287
    %s289 = sphi 0, %s287
    %s290 = sphi 0, %s289
    %s304 = sphi 0, %s290
    %s308 = sphi 0, %s308
    %s310 = sphi 0, %s308
    %s311 = sphi 0, %s310
    %s325 = sphi 0, %s311
    %s329 = sphi 0, %s329
    %s331 = sphi 0, %s329
    %s332 = sphi 0, %s331
    %s346 = sphi 0, %s332
    %s350 = sphi 0, %s350
    %s352 = sphi 0, %s350
    %s353 = sphi 0, %s352
    %s367 = sphi 0, %s353
    %s373 = sphi 0, %s375
    %s376 = sphi 0, %s373
    %s377 = sphi 0, %s376
    %s393 = sphi 0, %s377
  $region4: #{scaled_block_forward.1} parent=0 // loop_header_branch
    %25 = sbr.rel (%p23) target = $region8
  $region5: #{scaled_block_forward.1} parent=0 // loop_body
    %s27 = ssub.s32 %s22, 1
    %s28 = ssub.s32 %s22, 2
    %s29 = sadd.s32 %s22, 1
    %s30 = ssub.s32 %s22, %s29
    %p31 = scmp.eq.s32.totalorder %s30, 0
    %s33 = sadd.s32 %s32, 1
    %s34 = scalar_select %p31, %s32, %s33
    %p37 = pneg %p31
    %p38 = scmp.eq.s32.totalorder %s22, 1
    %p39 = por %p37, %p38
    %p40 = scmp.ne.s32.totalorder %s32, %s35
    %p41 = scmp.eq.s32.totalorder %s22, 0
    %p42 = por %p40, %p41
    %p43 = scmp.ne.s32.totalorder %s32, %s35
    %p44 = scmp.eq.s32.totalorder %s27, 1
    %p45 = por %p43, %p44
    %p46 = scmp.ne.s32.totalorder %s35, %s36
    %p47 = scmp.eq.s32.totalorder %s27, 0
    %p48 = por %p46, %p47
    %p49 = scmp.ne.s32.totalorder %s35, %s36
    %p50 = scmp.eq.s32.totalorder %s28, 1
    %p51 = por %p49, %p50
    %p53 = scmp.ne.s32.totalorder %s36, %s52
    %p54 = scmp.eq.s32.totalorder %s28, 0
    %p55 = por %p53, %p54
    %s57 = sadd.s32 %s56, 1
    %p60 = scmp.eq.s32.totalorder %s22, 1
    %p61 = scmp.ne.s32.totalorder %s56, %s58
    %p62 = scmp.eq.s32.totalorder %s22, 0
    %p63 = por %p61, %p62
    %p64 = scmp.ne.s32.totalorder %s56, %s58
    %p65 = scmp.eq.s32.totalorder %s27, 1
    %p66 = por %p64, %p65
    %p67 = scmp.ne.s32.totalorder %s58, %s59
    %p68 = scmp.eq.s32.totalorder %s27, 0
    %p69 = por %p67, %p68
    %p70 = scmp.ne.s32.totalorder %s58, %s59
    %p71 = scmp.eq.s32.totalorder %s28, 1
    %p72 = por %p70, %p71
    %p74 = scmp.ne.s32.totalorder %s59, %s73
    %p75 = scmp.eq.s32.totalorder %s28, 0
    %p76 = por %p74, %p75
    %s78 = sadd.s32 %s77, 1
    %p81 = scmp.eq.s32.totalorder %s22, 1
    %p82 = scmp.ne.s32.totalorder %s77, %s79
    %p83 = scmp.eq.s32.totalorder %s22, 0
    %p84 = por %p82, %p83
    %p85 = scmp.ne.s32.totalorder %s77, %s79
    %p86 = scmp.eq.s32.totalorder %s27, 1
    %p87 = por %p85, %p86
    %p88 = scmp.ne.s32.totalorder %s79, %s80
    %p89 = scmp.eq.s32.totalorder %s27, 0
    %p90 = por %p88, %p89
    %p91 = scmp.ne.s32.totalorder %s79, %s80
    %p92 = scmp.eq.s32.totalorder %s28, 1
    %p93 = por %p91, %p92
    %p95 = scmp.ne.s32.totalorder %s80, %s94
    %p96 = scmp.eq.s32.totalorder %s28, 0
    %p97 = por %p95, %p96
    %s99 = sadd.s32 %s98, 1
    %p102 = scmp.eq.s32.totalorder %s22, 1
    %p103 = scmp.ne.s32.totalorder %s98, %s100
    %p104 = scmp.eq.s32.totalorder %s22, 0
    %p105 = por %p103, %p104
    %p106 = scmp.ne.s32.totalorder %s98, %s100
    %p107 = scmp.eq.s32.totalorder %s27, 1
    %p108 = por %p106, %p107
    %p109 = scmp.ne.s32.totalorder %s100, %s101
    %p110 = scmp.eq.s32.totalorder %s27, 0
    %p111 = por %p109, %p110
    %p112 = scmp.ne.s32.totalorder %s100, %s101
    %p113 = scmp.eq.s32.totalorder %s28, 1
    %p114 = por %p112, %p113
    %p116 = scmp.ne.s32.totalorder %s101, %s115
    %p117 = scmp.eq.s32.totalorder %s28, 0
    %p118 = por %p116, %p117
    %s120 = sadd.s32 %s119, 1
    %p123 = scmp.eq.s32.totalorder %s22, 1
    %p124 = scmp.ne.s32.totalorder %s119, %s121
    %p125 = scmp.eq.s32.totalorder %s22, 0
    %p126 = por %p124, %p125
    %p127 = scmp.ne.s32.totalorder %s119, %s121
    %p128 = scmp.eq.s32.totalorder %s27, 1
    %p129 = por %p127, %p128
    %p130 = scmp.ne.s32.totalorder %s121, %s122
    %p131 = scmp.eq.s32.totalorder %s27, 0
    %p132 = por %p130, %p131
    %p133 = scmp.ne.s32.totalorder %s121, %s122
    %p134 = scmp.eq.s32.totalorder %s28, 1
    %p135 = por %p133, %p134
    %p137 = scmp.ne.s32.totalorder %s122, %s136
    %p138 = scmp.eq.s32.totalorder %s28, 0
    %p139 = por %p137, %p138
    %s141 = sadd.s32 %s140, 1
    %p144 = scmp.eq.s32.totalorder %s22, 1
    %p145 = scmp.ne.s32.totalorder %s140, %s142
    %p146 = scmp.eq.s32.totalorder %s22, 0
    %p147 = por %p145, %p146
    %p148 = scmp.ne.s32.totalorder %s140, %s142
    %p149 = scmp.eq.s32.totalorder %s27, 1
    %p150 = por %p148, %p149
    %p151 = scmp.ne.s32.totalorder %s142, %s143
    %p152 = scmp.eq.s32.totalorder %s27, 0
    %p153 = por %p151, %p152
    %p154 = scmp.ne.s32.totalorder %s142, %s143
    %p155 = scmp.eq.s32.totalorder %s28, 1
    %p156 = por %p154, %p155
    %p158 = scmp.ne.s32.totalorder %s143, %s157
    %p159 = scmp.eq.s32.totalorder %s28, 0
    %p160 = por %p158, %p159
    %s162 = sadd.s32 %s161, 1
    %p165 = scmp.eq.s32.totalorder %s22, 1
    %p166 = scmp.ne.s32.totalorder %s161, %s163
    %p167 = scmp.eq.s32.totalorder %s22, 0
    %p168 = por %p166, %p167
    %p169 = scmp.ne.s32.totalorder %s161, %s163
    %p170 = scmp.eq.s32.totalorder %s27, 1
    %p171 = por %p169, %p170
    %p172 = scmp.ne.s32.totalorder %s163, %s164
    %p173 = scmp.eq.s32.totalorder %s27, 0
    %p174 = por %p172, %p173
    %p175 = scmp.ne.s32.totalorder %s163, %s164
    %p176 = scmp.eq.s32.totalorder %s28, 1
    %p177 = por %p175, %p176
    %p179 = scmp.ne.s32.totalorder %s164, %s178
    %p180 = scmp.eq.s32.totalorder %s28, 0
    %p181 = por %p179, %p180
    %s183 = sadd.s32 %s182, 1
    %p186 = scmp.eq.s32.totalorder %s22, 1
    %p187 = scmp.ne.s32.totalorder %s182, %s184
    %p188 = scmp.eq.s32.totalorder %s22, 0
    %p189 = por %p187, %p188
    %p190 = scmp.ne.s32.totalorder %s182, %s184
    %p191 = scmp.eq.s32.totalorder %s27, 1
    %p192 = por %p190, %p191
    %p193 = scmp.ne.s32.totalorder %s184, %s185
    %p194 = scmp.eq.s32.totalorder %s27, 0
    %p195 = por %p193, %p194
    %p196 = scmp.ne.s32.totalorder %s184, %s185
    %p197 = scmp.eq.s32.totalorder %s28, 1
    %p198 = por %p196, %p197
    %p200 = scmp.ne.s32.totalorder %s185, %s199
    %p201 = scmp.eq.s32.totalorder %s28, 0
    %p202 = por %p200, %p201
    %s204 = sadd.s32 %s203, 1
    %p207 = scmp.eq.s32.totalorder %s22, 1
    %p208 = scmp.ne.s32.totalorder %s203, %s205
    %p209 = scmp.eq.s32.totalorder %s22, 0
    %p210 = por %p208, %p209
    %p211 = scmp.ne.s32.totalorder %s203, %s205
    %p212 = scmp.eq.s32.totalorder %s27, 1
    %p213 = por %p211, %p212
    %p214 = scmp.ne.s32.totalorder %s205, %s206
    %p215 = scmp.eq.s32.totalorder %s27, 0
    %p216 = por %p214, %p215
    %p217 = scmp.ne.s32.totalorder %s205, %s206
    %p218 = scmp.eq.s32.totalorder %s28, 1
    %p219 = por %p217, %p218
    %p221 = scmp.ne.s32.totalorder %s206, %s220
    %p222 = scmp.eq.s32.totalorder %s28, 0
    %p223 = por %p221, %p222
    %s225 = sadd.s32 %s224, 1
    %p228 = scmp.eq.s32.totalorder %s22, 1
    %p229 = scmp.ne.s32.totalorder %s224, %s226
    %p230 = scmp.eq.s32.totalorder %s22, 0
    %p231 = por %p229, %p230
    %p232 = scmp.ne.s32.totalorder %s224, %s226
    %p233 = scmp.eq.s32.totalorder %s27, 1
    %p234 = por %p232, %p233
    %p235 = scmp.ne.s32.totalorder %s226, %s227
    %p236 = scmp.eq.s32.totalorder %s27, 0
    %p237 = por %p235, %p236
    %p238 = scmp.ne.s32.totalorder %s226, %s227
    %p239 = scmp.eq.s32.totalorder %s28, 1
    %p240 = por %p238, %p239
    %p242 = scmp.ne.s32.totalorder %s227, %s241
    %p243 = scmp.eq.s32.totalorder %s28, 0
    %p244 = por %p242, %p243
    %s246 = sadd.s32 %s245, 1
    %p249 = scmp.eq.s32.totalorder %s22, 1
    %p250 = scmp.ne.s32.totalorder %s245, %s247
    %p251 = scmp.eq.s32.totalorder %s22, 0
    %p252 = por %p250, %p251
    %p253 = scmp.ne.s32.totalorder %s245, %s247
    %p254 = scmp.eq.s32.totalorder %s27, 1
    %p255 = por %p253, %p254
    %p256 = scmp.ne.s32.totalorder %s247, %s248
    %p257 = scmp.eq.s32.totalorder %s27, 0
    %p258 = por %p256, %p257
    %p259 = scmp.ne.s32.totalorder %s247, %s248
    %p260 = scmp.eq.s32.totalorder %s28, 1
    %p261 = por %p259, %p260
    %p263 = scmp.ne.s32.totalorder %s248, %s262
    %p264 = scmp.eq.s32.totalorder %s28, 0
    %p265 = por %p263, %p264
    %s267 = sadd.s32 %s266, 1
    %p270 = scmp.eq.s32.totalorder %s22, 1
    %p271 = scmp.ne.s32.totalorder %s266, %s268
    %p272 = scmp.eq.s32.totalorder %s22, 0
    %p273 = por %p271, %p272
    %p274 = scmp.ne.s32.totalorder %s266, %s268
    %p275 = scmp.eq.s32.totalorder %s27, 1
    %p276 = por %p274, %p275
    %p277 = scmp.ne.s32.totalorder %s268, %s269
    %p278 = scmp.eq.s32.totalorder %s27, 0
    %p279 = por %p277, %p278
    %p280 = scmp.ne.s32.totalorder %s268, %s269
    %p281 = scmp.eq.s32.totalorder %s28, 1
    %p282 = por %p280, %p281
    %p284 = scmp.ne.s32.totalorder %s269, %s283
    %p285 = scmp.eq.s32.totalorder %s28, 0
    %p286 = por %p284, %p285
    %s288 = sadd.s32 %s287, 1
    %p291 = scmp.eq.s32.totalorder %s22, 1
    %p292 = scmp.ne.s32.totalorder %s287, %s289
    %p293 = scmp.eq.s32.totalorder %s22, 0
    %p294 = por %p292, %p293
    %p295 = scmp.ne.s32.totalorder %s287, %s289
    %p296 = scmp.eq.s32.totalorder %s27, 1
    %p297 = por %p295, %p296
    %p298 = scmp.ne.s32.totalorder %s289, %s290
    %p299 = scmp.eq.s32.totalorder %s27, 0
    %p300 = por %p298, %p299
    %p301 = scmp.ne.s32.totalorder %s289, %s290
    %p302 = scmp.eq.s32.totalorder %s28, 1
    %p303 = por %p301, %p302
    %p305 = scmp.ne.s32.totalorder %s290, %s304
    %p306 = scmp.eq.s32.totalorder %s28, 0
    %p307 = por %p305, %p306
    %s309 = sadd.s32 %s308, 1
    %p312 = scmp.eq.s32.totalorder %s22, 1
    %p313 = scmp.ne.s32.totalorder %s308, %s310
    %p314 = scmp.eq.s32.totalorder %s22, 0
    %p315 = por %p313, %p314
    %p316 = scmp.ne.s32.totalorder %s308, %s310
    %p317 = scmp.eq.s32.totalorder %s27, 1
    %p318 = por %p316, %p317
    %p319 = scmp.ne.s32.totalorder %s310, %s311
    %p320 = scmp.eq.s32.totalorder %s27, 0
    %p321 = por %p319, %p320
    %p322 = scmp.ne.s32.totalorder %s310, %s311
    %p323 = scmp.eq.s32.totalorder %s28, 1
    %p324 = por %p322, %p323
    %p326 = scmp.ne.s32.totalorder %s311, %s325
    %p327 = scmp.eq.s32.totalorder %s28, 0
    %p328 = por %p326, %p327
    %s330 = sadd.s32 %s329, 1
    %p333 = scmp.eq.s32.totalorder %s22, 1
    %p334 = scmp.ne.s32.totalorder %s329, %s331
    %p335 = scmp.eq.s32.totalorder %s22, 0
    %p336 = por %p334, %p335
    %p337 = scmp.ne.s32.totalorder %s329, %s331
    %p338 = scmp.eq.s32.totalorder %s27, 1
    %p339 = por %p337, %p338
    %p340 = scmp.ne.s32.totalorder %s331, %s332
    %p341 = scmp.eq.s32.totalorder %s27, 0
    %p342 = por %p340, %p341
    %p343 = scmp.ne.s32.totalorder %s331, %s332
    %p344 = scmp.eq.s32.totalorder %s28, 1
    %p345 = por %p343, %p344
    %p347 = scmp.ne.s32.totalorder %s332, %s346
    %p348 = scmp.eq.s32.totalorder %s28, 0
    %p349 = por %p347, %p348
    %s351 = sadd.s32 %s350, 1
    %p354 = scmp.eq.s32.totalorder %s22, 1
    %p355 = scmp.ne.s32.totalorder %s350, %s352
    %p356 = scmp.eq.s32.totalorder %s22, 0
    %p357 = por %p355, %p356
    %p358 = scmp.ne.s32.totalorder %s350, %s352
    %p359 = scmp.eq.s32.totalorder %s27, 1
    %p360 = por %p358, %p359
    %p361 = scmp.ne.s32.totalorder %s352, %s353
    %p362 = scmp.eq.s32.totalorder %s27, 0
    %p363 = por %p361, %p362
    %p364 = scmp.ne.s32.totalorder %s352, %s353
    %p365 = scmp.eq.s32.totalorder %s28, 1
    %p366 = por %p364, %p365
    %p368 = scmp.ne.s32.totalorder %s353, %s367
    %p369 = scmp.eq.s32.totalorder %s28, 0
    %p370 = por %p368, %p369
    %s371 = ssub.s32 %s22, %s29
    %p372 = scmp.eq.s32.totalorder %s371, 0
    %s374 = sadd.s32 %s373, 1
    %s375 = scalar_select %p372, %s373, %s374
    %p378 = pneg %p372
    %p379 = scmp.eq.s32.totalorder %s22, 1
    %p380 = por %p378, %p379
    %p381 = scmp.ne.s32.totalorder %s373, %s376
    %p382 = scmp.eq.s32.totalorder %s22, 0
    %p383 = por %p381, %p382
    %p384 = scmp.ne.s32.totalorder %s373, %s376
    %p385 = scmp.eq.s32.totalorder %s27, 1
    %p386 = por %p384, %p385
    %p387 = scmp.ne.s32.totalorder %s376, %s377
    %p388 = scmp.eq.s32.totalorder %s27, 0
    %p389 = por %p387, %p388
    %p390 = scmp.ne.s32.totalorder %s376, %s377
    %p391 = scmp.eq.s32.totalorder %s28, 1
    %p392 = por %p390, %p391
    %p394 = scmp.ne.s32.totalorder %s377, %s393
    %p395 = scmp.eq.s32.totalorder %s28, 0
    %p396 = por %p394, %p395
    %p397 = scmp.le.s32.totalorder 1, %s22
    %p398 = scmp.lt.s32.totalorder %s22, 3
    %p399 = pnand %p397, %p398
    %p400 = pneg %p399
    // Predicated region
    $region9: #{scaled_block_forward.1} parent=5 // pred_check
      _
    $region10: #{scaled_block_forward.1} parent=5 // pred_check_branch
      %402 = sbr.rel (%p399) target = $region12
    $region11: #{scaled_block_forward.1} parent=5 // pred_region
      %s403 = ssub.s32 %s22, 1
      // Predicated region
      $region13: #{scaled_block_forward.1} parent=11 // pred_check
        %p404 = pneg %p69
      $region14: #{scaled_block_forward.1} parent=11 // pred_check_branch
        %406 = sbr.rel (%p404) target = $region16
      $region15: #{scaled_block_forward.1} parent=11 // pred_region
        _
      $region16: #{scaled_block_forward.1} parent=11 // pred_fallthru
        _
      // Predicated region
      $region17: #{scaled_block_forward.1} parent=11 // pred_check
        %p407 = pneg %p90
      $region18: #{scaled_block_forward.1} parent=11 // pred_check_branch
        %409 = sbr.rel (%p407) target = $region20
      $region19: #{scaled_block_forward.1} parent=11 // pred_region
        _
      $region20: #{scaled_block_forward.1} parent=11 // pred_fallthru
        _
      // Predicated region
      $region21: #{scaled_block_forward.1} parent=11 // pred_check
        %p410 = pneg %p111
      $region22: #{scaled_block_forward.1} parent=11 // pred_check_branch
        %412 = sbr.rel (%p410) target = $region24
      $region23: #{scaled_block_forward.1} parent=11 // pred_region
        _
      $region24: #{scaled_block_forward.1} parent=11 // pred_fallthru
        _
      // Predicated region
      $region25: #{scaled_block_forward.1} parent=11 // pred_check
        %p413 = pneg %p132
      $region26: #{scaled_block_forward.1} parent=11 // pred_check_branch
        %415 = sbr.rel (%p413) target = $region28
      $region27: #{scaled_block_forward.1} parent=11 // pred_region
        _
      $region28: #{scaled_block_forward.1} parent=11 // pred_fallthru
        _
      // Predicated region
      $region29: #{scaled_block_forward.1} parent=11 // pred_check
        %p416 = pneg %p153
      $region30: #{scaled_block_forward.1} parent=11 // pred_check_branch
        %418 = sbr.rel (%p416) target = $region32
      $region31: #{scaled_block_forward.1} parent=11 // pred_region
        _
      $region32: #{scaled_block_forward.1} parent=11 // pred_fallthru
        _
      // Predicated region
      $region33: #{scaled_block_forward.1} parent=11 // pred_check
        %p419 = pneg %p174
      $region34: #{scaled_block_forward.1} parent=11 // pred_check_branch
        %421 = sbr.rel (%p419) target = $region36
      $region35: #{scaled_block_forward.1} parent=11 // pred_region
        _
      $region36: #{scaled_block_forward.1} parent=11 // pred_fallthru
        _
      // Predicated region
      $region37: #{scaled_block_forward.1} parent=11 // pred_check
        %p422 = pneg %p195
      $region38: #{scaled_block_forward.1} parent=11 // pred_check_branch
        %424 = sbr.rel (%p422) target = $region40
      $region39: #{scaled_block_forward.1} parent=11 // pred_region
        _
      $region40: #{scaled_block_forward.1} parent=11 // pred_fallthru
        _
      // Predicated region
      $region41: #{scaled_block_forward.1} parent=11 // pred_check
        %p425 = pneg %p216
      $region42: #{scaled_block_forward.1} parent=11 // pred_check_branch
        %427 = sbr.rel (%p425) target = $region44
      $region43: #{scaled_block_forward.1} parent=11 // pred_region
        _
      $region44: #{scaled_block_forward.1} parent=11 // pred_fallthru
        _
      // Predicated region
      $region45: #{scaled_block_forward.1} parent=11 // pred_check
        %p428 = pneg %p237
      $region46: #{scaled_block_forward.1} parent=11 // pred_check_branch
        %430 = sbr.rel (%p428) target = $region48
      $region47: #{scaled_block_forward.1} parent=11 // pred_region
        _
      $region48: #{scaled_block_forward.1} parent=11 // pred_fallthru
        _
      // Predicated region
      $region49: #{scaled_block_forward.1} parent=11 // pred_check
        %p431 = pneg %p258
      $region50: #{scaled_block_forward.1} parent=11 // pred_check_branch
        %433 = sbr.rel (%p431) target = $region52
      $region51: #{scaled_block_forward.1} parent=11 // pred_region
        _
      $region52: #{scaled_block_forward.1} parent=11 // pred_fallthru
        _
      // Predicated region
      $region53: #{scaled_block_forward.1} parent=11 // pred_check
        %p434 = pneg %p279
      $region54: #{scaled_block_forward.1} parent=11 // pred_check_branch
        %436 = sbr.rel (%p434) target = $region56
      $region55: #{scaled_block_forward.1} parent=11 // pred_region
        _
      $region56: #{scaled_block_forward.1} parent=11 // pred_fallthru
        _
      // Predicated region
      $region57: #{scaled_block_forward.1} parent=11 // pred_check
        %p437 = pneg %p300
      $region58: #{scaled_block_forward.1} parent=11 // pred_check_branch
        %439 = sbr.rel (%p437) target = $region60
      $region59: #{scaled_block_forward.1} parent=11 // pred_region
        _
      $region60: #{scaled_block_forward.1} parent=11 // pred_fallthru
        _
      // Predicated region
      $region61: #{scaled_block_forward.1} parent=11 // pred_check
        %p440 = pneg %p321
      $region62: #{scaled_block_forward.1} parent=11 // pred_check_branch
        %442 = sbr.rel (%p440) target = $region64
      $region63: #{scaled_block_forward.1} parent=11 // pred_region
        _
      $region64: #{scaled_block_forward.1} parent=11 // pred_fallthru
        _
      // Predicated region
      $region65: #{scaled_block_forward.1} parent=11 // pred_check
        %p443 = pneg %p342
      $region66: #{scaled_block_forward.1} parent=11 // pred_check_branch
        %445 = sbr.rel (%p443) target = $region68
      $region67: #{scaled_block_forward.1} parent=11 // pred_region
        _
      $region68: #{scaled_block_forward.1} parent=11 // pred_fallthru
        _
      // Predicated region
      $region69: #{scaled_block_forward.1} parent=11 // pred_check
        %p446 = pneg %p363
      $region70: #{scaled_block_forward.1} parent=11 // pred_check_branch
        %448 = sbr.rel (%p446) target = $region72
      $region71: #{scaled_block_forward.1} parent=11 // pred_region
        _
      $region72: #{scaled_block_forward.1} parent=11 // pred_fallthru
        _
    $region12: #{scaled_block_forward.1} parent=5 // pred_fallthru
      _
    %p449 = scmp.lt.s32.totalorder %s22, 2
    // Predicated region
    $region73: #{scaled_block_forward.1} parent=5 // pred_check
      %p450 = pneg %p449
    $region74: #{scaled_block_forward.1} parent=5 // pred_check_branch
      %452 = sbr.rel (%p450) target = $region76
    $region75: #{scaled_block_forward.1} parent=5 // pred_region
      // Predicated region
      $region77: #{scaled_block_forward.1} parent=75 // pred_check
        %p453 = pneg %p42
      $region78: #{scaled_block_forward.1} parent=75 // pred_check_branch
        %455 = sbr.rel (%p453) target = $region80
      $region79: #{scaled_block_forward.1} parent=75 // pred_region
        %p456 = scmp.lt.s32.totalorder %s22, 1
        %s457 = scalar_select %p456, %s22, 1
        %s458 = smul.addr %s457, 2
        %s459 = smul.addr %s458, 4
        %s460 = scalar_lea.vmem %s0, %s459
      $region80: #{scaled_block_forward.1} parent=75 // pred_fallthru
        _
    $region76: #{scaled_block_forward.1} parent=5 // pred_fallthru
      _
    %p461 = scmp.le.s32.totalorder 1, %s22
    %p462 = scmp.lt.s32.totalorder %s22, 3
    %p463 = pnand %p461, %p462
    %p464 = pneg %p463
    // Predicated region
    $region81: #{scaled_block_forward.1} parent=5 // pred_check
      _
    $region82: #{scaled_block_forward.1} parent=5 // pred_check_branch
      %466 = sbr.rel (%p463) target = $region84
    $region83: #{scaled_block_forward.1} parent=5 // pred_region
      %s467 = ssub.s32 %s22, 1
      %p468 = scmp.lt.s32.totalorder %s27, 1
      %s469 = scalar_select %p468, %s27, 1
      %s470 = smul.addr %s469, 2
      %s471 = smul.addr %s470, 4
      %s472 = scalar_lea.vmem %s0, %s471
      %p473 = pneg %p48
      %p474 = pneg %p45
      %p475 = pneg %p69
      %p476 = pneg %p66
      %p477 = pneg %p90
      %p478 = pneg %p87
      %p479 = pneg %p111
      %p480 = pneg %p108
      %p481 = pneg %p132
      %p482 = pneg %p129
      %p483 = pneg %p153
      %p484 = pneg %p150
      %p485 = pneg %p174
      %p486 = pneg %p171
      %p487 = pneg %p195
      %p488 = pneg %p192
      %p489 = pneg %p216
      %p490 = pneg %p213
      %p491 = pneg %p237
      %p492 = pneg %p234
      %p493 = pneg %p258
      %p494 = pneg %p255
      %p495 = pneg %p279
      %p496 = pneg %p276
      %p497 = pneg %p300
      %p498 = pneg %p297
      %p499 = pneg %p321
      %p500 = pneg %p318
      %p501 = pneg %p342
      %p502 = pneg %p339
      %p503 = pneg %p363
      %p504 = pneg %p360
      %p505 = pneg %p389
      %p506 = pneg %p386
      %p507 = scmp.lt.s32.totalorder %s27, 1
      %s508 = scalar_select %p507, %s27, 1
      %s509 = smul.addr %s508, 2
      %s510 = smul.addr %s509, 8
      %s511 = scalar_lea.vmem %s16, %s510
      %p512 = scmp.lt.s32.totalorder %s27, 1
      %s513 = scalar_select %p512, %s27, 1
      %s514 = smul.addr %s513, 2
      %s515 = smul.addr %s514, 4
      %s516 = scalar_lea.vmem %s0, %s515
      %p517 = scmp.lt.s32.totalorder %s27, 1
      %s518 = scalar_select %p517, %s27, 1
      %s519 = smul.addr %s518, 2
      %s520 = smul.addr %s519, 8
      %s521 = scalar_lea.vmem %s16, %s520
      %v522 = vld [vmem:[%s516] sm:$0xff]
      %v523 = vld [vmem:[%s1] sm:$0xff]
      %v524 = vld [vmem:[%s2] sm:$0xff]
      %526 = vset.pattern.permute.xlu0 0
      %527 = vperm.xlu0 %526, %v524
      %v528 = vpop.permute.xlu0 %527
      %v531 = vcombine.high %v522, %v522
      %vm532 = vcmask 31744
      %v534 = vsel %vm532, %v523, 0
      %vm536 = vcmask 1043456
      %v537 = vsel %vm536, %v522, 0
      %v539 = vsel %vm536, %v531, 0
      %541 = vmatprep.subr.mxu0 %v539
      %542 = vmatpush1.msra.mxu0 %v537
      %543 = vmatprep.subr.mxu0 0.0
      %544 = vmatpush1.msra.mxu0 0.0
      %545 = vmatprep.subr.mxu0 0.0
      %546 = vmatpush1.msra.mxu0 0.0
      %547 = vmatprep.subr.mxu0 0.0
      %548 = vmatpush1.msra.mxu0 0.0
      %549 = vmatprep.subr.mxu0 0.0
      %550 = vmatpush1.msra.mxu0 0.0
      %551 = vmatprep.subr.mxu0 0.0
      %552 = vmatpush1.msra.mxu0 0.0
      %553 = vmatprep.subr.mxu0 0.0
      %554 = vmatpush1.msra.mxu0 0.0
      %555 = vmatprep.subr.mxu0 0.0
      %556 = vmatpush1.msra.mxu0 0.0
      %557 = vmatprep.subr.mxu0 0.0
      %558 = vmatpush1.msra.mxu0 0.0
      %559 = vmatprep.subr.mxu0 0.0
      %560 = vmatpush1.msra.mxu0 0.0
      %561 = vmatprep.subr.mxu0 0.0
      %562 = vmatpush1.msra.mxu0 0.0
      %563 = vmatprep.subr.mxu0 0.0
      %564 = vmatpush1.msra.mxu0 0.0
      %565 = vmatprep.subr.mxu0 0.0
      %566 = vmatpush1.msra.mxu0 0.0
      %567 = vmatprep.subr.mxu0 0.0
      %568 = vmatpush1.msra.mxu0 0.0
      %569 = vmatprep.subr.mxu0 0.0
      %570 = vmatpush1.msra.mxu0 0.0
      %571 = vmatprep.subr.mxu0 0.0
      %572 = vmatpush1.msra.mxu0 0.0
      %573 = vmatprep.subr.mxu0 0.0
      %574 = vmatpush1.msra.mxu0 0.0
      %575 = vmatprep.subr.mxu0 0.0
      %576 = vmatpush1.msra.mxu0 0.0
      %577 = vmatprep.subr.mxu0 0.0
      %578 = vmatpush1.msra.mxu0 0.0
      %579 = vmatprep.subr.mxu0 0.0
      %580 = vmatpush1.msra.mxu0 0.0
      %581 = vmatprep.subr.mxu0 0.0
      %582 = vmatpush1.msra.mxu0 0.0
      %583 = vmatprep.subr.mxu0 0.0
      %584 = vmatpush1.msra.mxu0 0.0
      %585 = vmatprep.subr.mxu0 0.0
      %586 = vmatpush1.msra.mxu0 0.0
      %587 = vmatprep.subr.mxu0 0.0
      %588 = vmatpush1.msra.mxu0 0.0
      %589 = vmatprep.subr.mxu0 0.0
      %590 = vmatpush1.msra.mxu0 0.0
      %591 = vmatprep.subr.mxu0 0.0
      %592 = vmatpush1.msra.mxu0 0.0
      %593 = vmatprep.subr.mxu0 0.0
      %594 = vmatpush1.msra.mxu0 0.0
      %595 = vmatprep.subr.mxu0 0.0
      %596 = vmatpush1.msra.mxu0 0.0
      %597 = vmatprep.subr.mxu0 0.0
      %598 = vmatpush1.msra.mxu0 0.0
      %599 = vmatprep.subr.mxu0 0.0
      %600 = vmatpush1.msra.mxu0 0.0
      %601 = vmatprep.subr.mxu0 0.0
      %602 = vmatpush1.msra.mxu0 0.0
      %603 = vmatprep.subr.mxu0 0.0
      %604 = vmatpush1.msra.mxu0 0.0
      %605 = vmatprep.mubr.f32.mxu0 0.0
      %606 = vmatmul.mubr.f32.gmra.mrb[0].mxu0 %v534
      %v607 = vpop.f32.mrb[0].mxu0
      %v608 = vadd.f32 %v528, %v607
      %v609 = vpop.f32.mrb[0].mxu0
      %v610 = vadd.f32 %v528, %v609
      %611 = vdwg.mxu0
      %v612 = vmax.f32 %v608, 0.0
      %v613 = vmax.f32 %v610, 0.0
      %v614 = vld [vmem:[%s3] sm:$0xff]
      %v615 = vld [vmem:[%s4] sm:$0xff]
      %617 = vset.pattern.permute.xlu0 0
      %618 = vperm.xlu0 %617, %v615
      %v619 = vpop.permute.xlu0 %618
      %vm621 = vcmask 64512
      %v623 = vsel %vm621, %v614, 0
      %625 = vmatprep.subr.mxu0 %v613
      %626 = vmatpush1.msra.mxu0 %v612
      %627 = vmatprep.subr.mxu0 0.0
      %628 = vmatpush1.msra.mxu0 0.0
      %629 = vmatprep.subr.mxu0 0.0
      %630 = vmatpush1.msra.mxu0 0.0
      %631 = vmatprep.subr.mxu0 0.0
      %632 = vmatpush1.msra.mxu0 0.0
      %633 = vmatprep.subr.mxu0 0.0
      %634 = vmatpush1.msra.mxu0 0.0
      %635 = vmatprep.subr.mxu0 0.0
      %636 = vmatpush1.msra.mxu0 0.0
      %637 = vmatprep.subr.mxu0 0.0
      %638 = vmatpush1.msra.mxu0 0.0
      %639 = vmatprep.subr.mxu0 0.0
      %640 = vmatpush1.msra.mxu0 0.0
      %641 = vmatprep.subr.mxu0 0.0
      %642 = vmatpush1.msra.mxu0 0.0
      %643 = vmatprep.subr.mxu0 0.0
      %644 = vmatpush1.msra.mxu0 0.0
      %645 = vmatprep.subr.mxu0 0.0
      %646 = vmatpush1.msra.mxu0 0.0
      %647 = vmatprep.subr.mxu0 0.0
      %648 = vmatpush1.msra.mxu0 0.0
      %649 = vmatprep.subr.mxu0 0.0
      %650 = vmatpush1.msra.mxu0 0.0
      %651 = vmatprep.subr.mxu0 0.0
      %652 = vmatpush1.msra.mxu0 0.0
      %653 = vmatprep.subr.mxu0 0.0
      %654 = vmatpush1.msra.mxu0 0.0
      %655 = vmatprep.subr.mxu0 0.0
      %656 = vmatpush1.msra.mxu0 0.0
      %657 = vmatprep.subr.mxu0 0.0
      %658 = vmatpush1.msra.mxu0 0.0
      %659 = vmatprep.subr.mxu0 0.0
      %660 = vmatpush1.msra.mxu0 0.0
      %661 = vmatprep.subr.mxu0 0.0
      %662 = vmatpush1.msra.mxu0 0.0
      %663 = vmatprep.subr.mxu0 0.0
      %664 = vmatpush1.msra.mxu0 0.0
      %665 = vmatprep.subr.mxu0 0.0
      %666 = vmatpush1.msra.mxu0 0.0
      %667 = vmatprep.subr.mxu0 0.0
      %668 = vmatpush1.msra.mxu0 0.0
      %669 = vmatprep.subr.mxu0 0.0
      %670 = vmatpush1.msra.mxu0 0.0
      %671 = vmatprep.subr.mxu0 0.0
      %672 = vmatpush1.msra.mxu0 0.0
      %673 = vmatprep.subr.mxu0 0.0
      %674 = vmatpush1.msra.mxu0 0.0
      %675 = vmatprep.subr.mxu0 0.0
      %676 = vmatpush1.msra.mxu0 0.0
      %677 = vmatprep.subr.mxu0 0.0
      %678 = vmatpush1.msra.mxu0 0.0
      %679 = vmatprep.subr.mxu0 0.0
      %680 = vmatpush1.msra.mxu0 0.0
      %681 = vmatprep.subr.mxu0 0.0
      %682 = vmatpush1.msra.mxu0 0.0
      %683 = vmatprep.subr.mxu0 0.0
      %684 = vmatpush1.msra.mxu0 0.0
      %685 = vmatprep.subr.mxu0 0.0
      %686 = vmatpush1.msra.mxu0 0.0
      %687 = vmatprep.subr.mxu0 0.0
      %688 = vmatpush1.msra.mxu0 0.0
      %689 = vmatprep.mubr.f32.mxu0 0.0
      %690 = vmatmul.mubr.f32.gmra.mrb[0].mxu0 %v623
      %v691 = vpop.f32.mrb[0].mxu0
      %v692 = vadd.f32 %v619, %v691
      %v693 = vpop.f32.mrb[0].mxu0
      %v694 = vadd.f32 %v619, %v693
      %695 = vdwg.mxu0
      %v696 = vld [vmem:[%s5] sm:$0xff]
      %v697 = vld [vmem:[%s6] sm:$0xff]
      %699 = vset.pattern.permute.xlu0 0
      %700 = vperm.xlu0 %699, %v697
      %v701 = vpop.permute.xlu0 %700
      %v704 = vsel %vm532, %v696, 0
      %706 = vmatprep.subr.mxu0 %v539
      %707 = vmatpush1.msra.mxu0 %v537
      %708 = vmatprep.subr.mxu0 0.0
      %709 = vmatpush1.msra.mxu0 0.0
      %710 = vmatprep.subr.mxu0 0.0
      %711 = vmatpush1.msra.mxu0 0.0
      %712 = vmatprep.subr.mxu0 0.0
      %713 = vmatpush1.msra.mxu0 0.0
      %714 = vmatprep.subr.mxu0 0.0
      %715 = vmatpush1.msra.mxu0 0.0
      %716 = vmatprep.subr.mxu0 0.0
      %717 = vmatpush1.msra.mxu0 0.0
      %718 = vmatprep.subr.mxu0 0.0
      %719 = vmatpush1.msra.mxu0 0.0
      %720 = vmatprep.subr.mxu0 0.0
      %721 = vmatpush1.msra.mxu0 0.0
      %722 = vmatprep.subr.mxu0 0.0
      %723 = vmatpush1.msra.mxu0 0.0
      %724 = vmatprep.subr.mxu0 0.0
      %725 = vmatpush1.msra.mxu0 0.0
      %726 = vmatprep.subr.mxu0 0.0
      %727 = vmatpush1.msra.mxu0 0.0
      %728 = vmatprep.subr.mxu0 0.0
      %729 = vmatpush1.msra.mxu0 0.0
      %730 = vmatprep.subr.mxu0 0.0
      %731 = vmatpush1.msra.mxu0 0.0
      %732 = vmatprep.subr.mxu0 0.0
      %733 = vmatpush1.msra.mxu0 0.0
      %734 = vmatprep.subr.mxu0 0.0
      %735 = vmatpush1.msra.mxu0 0.0
      %736 = vmatprep.subr.mxu0 0.0
      %737 = vmatpush1.msra.mxu0 0.0
      %738 = vmatprep.subr.mxu0 0.0
      %739 = vmatpush1.msra.mxu0 0.0
      %740 = vmatprep.subr.mxu0 0.0
      %741 = vmatpush1.msra.mxu0 0.0
      %742 = vmatprep.subr.mxu0 0.0
      %743 = vmatpush1.msra.mxu0 0.0
      %744 = vmatprep.subr.mxu0 0.0
      %745 = vmatpush1.msra.mxu0 0.0
      %746 = vmatprep.subr.mxu0 0.0
      %747 = vmatpush1.msra.mxu0 0.0
      %748 = vmatprep.subr.mxu0 0.0
      %749 = vmatpush1.msra.mxu0 0.0
      %750 = vmatprep.subr.mxu0 0.0
      %751 = vmatpush1.msra.mxu0 0.0
      %752 = vmatprep.subr.mxu0 0.0
      %753 = vmatpush1.msra.mxu0 0.0
      %754 = vmatprep.subr.mxu0 0.0
      %755 = vmatpush1.msra.mxu0 0.0
      %756 = vmatprep.subr.mxu0 0.0
      %757 = vmatpush1.msra.mxu0 0.0
      %758 = vmatprep.subr.mxu0 0.0
      %759 = vmatpush1.msra.mxu0 0.0
      %760 = vmatprep.subr.mxu0 0.0
      %761 = vmatpush1.msra.mxu0 0.0
      %762 = vmatprep.subr.mxu0 0.0
      %763 = vmatpush1.msra.mxu0 0.0
      %764 = vmatprep.subr.mxu0 0.0
      %765 = vmatpush1.msra.mxu0 0.0
      %766 = vmatprep.subr.mxu0 0.0
      %767 = vmatpush1.msra.mxu0 0.0
      %768 = vmatprep.subr.mxu0 0.0
      %769 = vmatpush1.msra.mxu0 0.0
      %770 = vmatprep.mubr.f32.mxu0 0.0
      %771 = vmatmul.mubr.f32.gmra.mrb[0].mxu0 %v704
      %v772 = vpop.f32.mrb[0].mxu0
      %v773 = vadd.f32 %v701, %v772
      %v774 = vpop.f32.mrb[0].mxu0
      %v775 = vadd.f32 %v701, %v774
      %776 = vdwg.mxu0
      %v777 = vmax.f32 %v773, 0.0
      %v778 = vmax.f32 %v775, 0.0
      %v779 = vld [vmem:[%s7] sm:$0xff]
      %v780 = vld [vmem:[%s8] sm:$0xff]
      %782 = vset.pattern.permute.xlu0 0
      %783 = vperm.xlu0 %782, %v780
      %v784 = vpop.permute.xlu0 %783
      %v787 = vsel %vm621, %v779, 0
      %789 = vmatprep.subr.mxu0 %v778
      %790 = vmatpush1.msra.mxu0 %v777
      %791 = vmatprep.subr.mxu0 0.0
      %792 = vmatpush1.msra.mxu0 0.0
      %793 = vmatprep.subr.mxu0 0.0
      %794 = vmatpush1.msra.mxu0 0.0
      %795 = vmatprep.subr.mxu0 0.0
      %796 = vmatpush1.msra.mxu0 0.0
      %797 = vmatprep.subr.mxu0 0.0
      %798 = vmatpush1.msra.mxu0 0.0
      %799 = vmatprep.subr.mxu0 0.0
      %800 = vmatpush1.msra.mxu0 0.0
      %801 = vmatprep.subr.mxu0 0.0
      %802 = vmatpush1.msra.mxu0 0.0
      %803 = vmatprep.subr.mxu0 0.0
      %804 = vmatpush1.msra.mxu0 0.0
      %805 = vmatprep.subr.mxu0 0.0
      %806 = vmatpush1.msra.mxu0 0.0
      %807 = vmatprep.subr.mxu0 0.0
      %808 = vmatpush1.msra.mxu0 0.0
      %809 = vmatprep.subr.mxu0 0.0
      %810 = vmatpush1.msra.mxu0 0.0
      %811 = vmatprep.subr.mxu0 0.0
      %812 = vmatpush1.msra.mxu0 0.0
      %813 = vmatprep.subr.mxu0 0.0
      %814 = vmatpush1.msra.mxu0 0.0
      %815 = vmatprep.subr.mxu0 0.0
      %816 = vmatpush1.msra.mxu0 0.0
      %817 = vmatprep.subr.mxu0 0.0
      %818 = vmatpush1.msra.mxu0 0.0
      %819 = vmatprep.subr.mxu0 0.0
      %820 = vmatpush1.msra.mxu0 0.0
      %821 = vmatprep.subr.mxu0 0.0
      %822 = vmatpush1.msra.mxu0 0.0
      %823 = vmatprep.subr.mxu0 0.0
      %824 = vmatpush1.msra.mxu0 0.0
      %825 = vmatprep.subr.mxu0 0.0
      %826 = vmatpush1.msra.mxu0 0.0
      %827 = vmatprep.subr.mxu0 0.0
      %828 = vmatpush1.msra.mxu0 0.0
      %829 = vmatprep.subr.mxu0 0.0
      %830 = vmatpush1.msra.mxu0 0.0
      %831 = vmatprep.subr.mxu0 0.0
      %832 = vmatpush1.msra.mxu0 0.0
      %833 = vmatprep.subr.mxu0 0.0
      %834 = vmatpush1.msra.mxu0 0.0
      %835 = vmatprep.subr.mxu0 0.0
      %836 = vmatpush1.msra.mxu0 0.0
      %837 = vmatprep.subr.mxu0 0.0
      %838 = vmatpush1.msra.mxu0 0.0
      %839 = vmatprep.subr.mxu0 0.0
      %840 = vmatpush1.msra.mxu0 0.0
      %841 = vmatprep.subr.mxu0 0.0
      %842 = vmatpush1.msra.mxu0 0.0
      %843 = vmatprep.subr.mxu0 0.0
      %844 = vmatpush1.msra.mxu0 0.0
      %845 = vmatprep.subr.mxu0 0.0
      %846 = vmatpush1.msra.mxu0 0.0
      %847 = vmatprep.subr.mxu0 0.0
      %848 = vmatpush1.msra.mxu0 0.0
      %849 = vmatprep.subr.mxu0 0.0
      %850 = vmatpush1.msra.mxu0 0.0
      %851 = vmatprep.subr.mxu0 0.0
      %852 = vmatpush1.msra.mxu0 0.0
      %853 = vmatprep.mubr.f32.mxu0 0.0
      %854 = vmatmul.mubr.f32.gmra.mrb[0].mxu0 %v787
      %v855 = vpop.f32.mrb[0].mxu0
      %v856 = vadd.f32 %v784, %v855
      %v857 = vpop.f32.mrb[0].mxu0
      %v858 = vadd.f32 %v784, %v857
      %859 = vdwg.mxu0
      %861 = vrot.lane.b32.xlu0 %v692, 112
      %v862 = vpop.permute.xlu0 %861
      %864 = vrot.lane.b32.xlu0 %v692, 96
      %v865 = vpop.permute.xlu0 %864
      %867 = vrot.lane.b32.xlu0 %v692, 80
      %v868 = vpop.permute.xlu0 %867
      %870 = vrot.lane.b32.xlu0 %v692, 64
      %v871 = vpop.permute.xlu0 %870
      %873 = vrot.lane.b32.xlu0 %v692, 48
      %v874 = vpop.permute.xlu0 %873
      %876 = vrot.lane.b32.xlu0 %v692, 32
      %v877 = vpop.permute.xlu0 %876
      %879 = vrot.lane.b32.xlu0 %v692, 16
      %v880 = vpop.permute.xlu0 %879
      %883 = vrot.lane.b32.xlu0 %v694, 112
      %v884 = vpop.permute.xlu0 %883
      %886 = vrot.lane.b32.xlu0 %v694, 96
      %v887 = vpop.permute.xlu0 %886
      %889 = vrot.lane.b32.xlu0 %v694, 80
      %v890 = vpop.permute.xlu0 %889
      %892 = vrot.lane.b32.xlu0 %v694, 64
      %v893 = vpop.permute.xlu0 %892
      %895 = vrot.lane.b32.xlu0 %v694, 48
      %v896 = vpop.permute.xlu0 %895
      %898 = vrot.lane.b32.xlu0 %v694, 32
      %v899 = vpop.permute.xlu0 %898
      %901 = vrot.lane.b32.xlu0 %v694, 16
      %v902 = vpop.permute.xlu0 %901
      %v904 = vcombine.low %v692, %v865
      %v905 = vcombine.high %v692, %v865
      %v907 = vunpack.c.l.s4 1983009808
      %v908 = vunpack.c.0.s8 %v907
      %v909 = vlaneseq
      %v910 = vshrl.u32 %v909, 7
      %v911 = vsub.s32 %v908, %v910
      %v912 = vrot.slane %v904, %v911
      %v914 = vunpack.c.l.s4 1983009808
      %v915 = vunpack.c.0.s8 %v914
      %v916 = vlaneseq
      %v917 = vshrl.u32 %v916, 7
      %v918 = vsub.s32 %v915, %v917
      %v919 = vrot.slane %v905, %v918
      %v920 = vcombine.low %v862, %v868
      %v921 = vcombine.high %v862, %v868
      %v923 = vunpack.c.l.s4 1983009808
      %v924 = vunpack.c.0.s8 %v923
      %v925 = vlaneseq
      %v926 = vshrl.u32 %v925, 7
      %v927 = vsub.s32 %v924, %v926
      %v928 = vrot.slane %v920, %v927
      %v930 = vunpack.c.l.s4 1983009808
      %v931 = vunpack.c.0.s8 %v930
      %v932 = vlaneseq
      %v933 = vshrl.u32 %v932, 7
      %v934 = vsub.s32 %v931, %v933
      %v935 = vrot.slane %v921, %v934
      %v936 = vcombine.low %v871, %v877
      %v937 = vcombine.high %v871, %v877
      %v939 = vunpack.c.l.s4 1983009808
      %v940 = vunpack.c.0.s8 %v939
      %v941 = vlaneseq
      %v942 = vshrl.u32 %v941, 7
      %v943 = vsub.s32 %v940, %v942
      %v944 = vrot.slane %v936, %v943
      %v946 = vunpack.c.l.s4 1983009808
      %v947 = vunpack.c.0.s8 %v946
      %v948 = vlaneseq
      %v949 = vshrl.u32 %v948, 7
      %v950 = vsub.s32 %v947, %v949
      %v951 = vrot.slane %v937, %v950
      %v952 = vcombine.low %v874, %v880
      %v953 = vcombine.high %v874, %v880
      %v955 = vunpack.c.l.s4 1983009808
      %v956 = vunpack.c.0.s8 %v955
      %v957 = vlaneseq
      %v958 = vshrl.u32 %v957, 7
      %v959 = vsub.s32 %v956, %v958
      %v960 = vrot.slane %v952, %v959
      %v962 = vunpack.c.l.s4 1983009808
      %v963 = vunpack.c.0.s8 %v962
      %v964 = vlaneseq
      %v965 = vshrl.u32 %v964, 7
      %v966 = vsub.s32 %v963, %v965
      %v967 = vrot.slane %v953, %v966
      %v968 = vcombine.low %v912, %v928
      %v969 = vcombine.high %v912, %v928
      %v971 = vunpack.c.l.s4 1934713408
      %v972 = vunpack.c.0.s8 %v971
      %v973 = vlaneseq
      %v974 = vshrl.u32 %v973, 7
      %v975 = vsub.s32 %v972, %v974
      %v976 = vrot.slane %v968, %v975
      %v978 = vunpack.c.l.s4 1934713408
      %v979 = vunpack.c.0.s8 %v978
      %v980 = vlaneseq
      %v981 = vshrl.u32 %v980, 7
      %v982 = vsub.s32 %v979, %v981
      %v983 = vrot.slane %v969, %v982
      %v984 = vcombine.low %v919, %v935
      %v985 = vcombine.high %v919, %v935
      %v987 = vunpack.c.l.s4 1934713408
      %v988 = vunpack.c.0.s8 %v987
      %v989 = vlaneseq
      %v990 = vshrl.u32 %v989, 7
      %v991 = vsub.s32 %v988, %v990
      %v992 = vrot.slane %v984, %v991
      %v994 = vunpack.c.l.s4 1934713408
      %v995 = vunpack.c.0.s8 %v994
      %v996 = vlaneseq
      %v997 = vshrl.u32 %v996, 7
      %v998 = vsub.s32 %v995, %v997
      %v999 = vrot.slane %v985, %v998
      %v1000 = vcombine.low %v944, %v960
      %v1001 = vcombine.high %v944, %v960
      %v1003 = vunpack.c.l.s4 1934713408
      %v1004 = vunpack.c.0.s8 %v1003
      %v1005 = vlaneseq
      %v1006 = vshrl.u32 %v1005, 7
      %v1007 = vsub.s32 %v1004, %v1006
      %v1008 = vrot.slane %v1000, %v1007
      %v1010 = vunpack.c.l.s4 1934713408
      %v1011 = vunpack.c.0.s8 %v1010
      %v1012 = vlaneseq
      %v1013 = vshrl.u32 %v1012, 7
      %v1014 = vsub.s32 %v1011, %v1013
      %v1015 = vrot.slane %v1001, %v1014
      %v1016 = vcombine.low %v951, %v967
      %v1017 = vcombine.high %v951, %v967
      %v1019 = vunpack.c.l.s4 1934713408
      %v1020 = vunpack.c.0.s8 %v1019
      %v1021 = vlaneseq
      %v1022 = vshrl.u32 %v1021, 7
      %v1023 = vsub.s32 %v1020, %v1022
      %v1024 = vrot.slane %v1016, %v1023
      %v1026 = vunpack.c.l.s4 1934713408
      %v1027 = vunpack.c.0.s8 %v1026
      %v1028 = vlaneseq
      %v1029 = vshrl.u32 %v1028, 7
      %v1030 = vsub.s32 %v1027, %v1029
      %v1031 = vrot.slane %v1017, %v1030
      %v1032 = vcombine.low %v976, %v1008
      %v1033 = vcombine.high %v976, %v1008
      %v1034 = vcombine.low %v983, %v1015
      %v1035 = vcombine.high %v983, %v1015
      %v1036 = vcombine.low %v992, %v1024
      %v1037 = vcombine.high %v992, %v1024
      %v1038 = vcombine.low %v999, %v1031
      %v1039 = vcombine.high %v999, %v1031
      %v1040 = vcombine.low %v694, %v887
      %v1041 = vcombine.high %v694, %v887
      %v1043 = vunpack.c.l.s4 1983009808
      %v1044 = vunpack.c.0.s8 %v1043
      %v1045 = vlaneseq
      %v1046 = vshrl.u32 %v1045, 7
      %v1047 = vsub.s32 %v1044, %v1046
      %v1048 = vrot.slane %v1040, %v1047
      %v1050 = vunpack.c.l.s4 1983009808
      %v1051 = vunpack.c.0.s8 %v1050
      %v1052 = vlaneseq
      %v1053 = vshrl.u32 %v1052, 7
      %v1054 = vsub.s32 %v1051, %v1053
      %v1055 = vrot.slane %v1041, %v1054
      %v1056 = vcombine.low %v884, %v890
      %v1057 = vcombine.high %v884, %v890
      %v1059 = vunpack.c.l.s4 1983009808
      %v1060 = vunpack.c.0.s8 %v1059
      %v1061 = vlaneseq
      %v1062 = vshrl.u32 %v1061, 7
      %v1063 = vsub.s32 %v1060, %v1062
      %v1064 = vrot.slane %v1056, %v1063
      %v1066 = vunpack.c.l.s4 1983009808
      %v1067 = vunpack.c.0.s8 %v1066
      %v1068 = vlaneseq
      %v1069 = vshrl.u32 %v1068, 7
      %v1070 = vsub.s32 %v1067, %v1069
      %v1071 = vrot.slane %v1057, %v1070
      %v1072 = vcombine.low %v893, %v899
      %v1073 = vcombine.high %v893, %v899
      %v1075 = vunpack.c.l.s4 1983009808
      %v1076 = vunpack.c.0.s8 %v1075
      %v1077 = vlaneseq
      %v1078 = vshrl.u32 %v1077, 7
      %v1079 = vsub.s32 %v1076, %v1078
      %v1080 = vrot.slane %v1072, %v1079
      %v1082 = vunpack.c.l.s4 1983009808
      %v1083 = vunpack.c.0.s8 %v1082
      %v1084 = vlaneseq
      %v1085 = vshrl.u32 %v1084, 7
      %v1086 = vsub.s32 %v1083, %v1085
      %v1087 = vrot.slane %v1073, %v1086
      %v1088 = vcombine.low %v896, %v902
      %v1089 = vcombine.high %v896, %v902
      %v1091 = vunpack.c.l.s4 1983009808
      %v1092 = vunpack.c.0.s8 %v1091
      %v1093 = vlaneseq
      %v1094 = vshrl.u32 %v1093, 7
      %v1095 = vsub.s32 %v1092, %v1094
      %v1096 = vrot.slane %v1088, %v1095
      %v1098 = vunpack.c.l.s4 1983009808
      %v1099 = vunpack.c.0.s8 %v1098
      %v1100 = vlaneseq
      %v1101 = vshrl.u32 %v1100, 7
      %v1102 = vsub.s32 %v1099, %v1101
      %v1103 = vrot.slane %v1089, %v1102
      %v1104 = vcombine.low %v1048, %v1064
      %v1105 = vcombine.high %v1048, %v1064
      %v1107 = vunpack.c.l.s4 1934713408
      %v1108 = vunpack.c.0.s8 %v1107
      %v1109 = vlaneseq
      %v1110 = vshrl.u32 %v1109, 7
      %v1111 = vsub.s32 %v1108, %v1110
      %v1112 = vrot.slane %v1104, %v1111
      %v1114 = vunpack.c.l.s4 1934713408
      %v1115 = vunpack.c.0.s8 %v1114
      %v1116 = vlaneseq
      %v1117 = vshrl.u32 %v1116, 7
      %v1118 = vsub.s32 %v1115, %v1117
      %v1119 = vrot.slane %v1105, %v1118
      %v1120 = vcombine.low %v1055, %v1071
      %v1121 = vcombine.high %v1055, %v1071
      %v1123 = vunpack.c.l.s4 1934713408
      %v1124 = vunpack.c.0.s8 %v1123
      %v1125 = vlaneseq
      %v1126 = vshrl.u32 %v1125, 7
      %v1127 = vsub.s32 %v1124, %v1126
      %v1128 = vrot.slane %v1120, %v1127
      %v1130 = vunpack.c.l.s4 1934713408
      %v1131 = vunpack.c.0.s8 %v1130
      %v1132 = vlaneseq
      %v1133 = vshrl.u32 %v1132, 7
      %v1134 = vsub.s32 %v1131, %v1133
      %v1135 = vrot.slane %v1121, %v1134
      %v1136 = vcombine.low %v1080, %v1096
      %v1137 = vcombine.high %v1080, %v1096
      %v1139 = vunpack.c.l.s4 1934713408
      %v1140 = vunpack.c.0.s8 %v1139
      %v1141 = vlaneseq
      %v1142 = vshrl.u32 %v1141, 7
      %v1143 = vsub.s32 %v1140, %v1142
      %v1144 = vrot.slane %v1136, %v1143
      %v1146 = vunpack.c.l.s4 1934713408
      %v1147 = vunpack.c.0.s8 %v1146
      %v1148 = vlaneseq
      %v1149 = vshrl.u32 %v1148, 7
      %v1150 = vsub.s32 %v1147, %v1149
      %v1151 = vrot.slane %v1137, %v1150
      %v1152 = vcombine.low %v1087, %v1103
      %v1153 = vcombine.high %v1087, %v1103
      %v1155 = vunpack.c.l.s4 1934713408
      %v1156 = vunpack.c.0.s8 %v1155
      %v1157 = vlaneseq
      %v1158 = vshrl.u32 %v1157, 7
      %v1159 = vsub.s32 %v1156, %v1158
      %v1160 = vrot.slane %v1152, %v1159
      %v1162 = vunpack.c.l.s4 1934713408
      %v1163 = vunpack.c.0.s8 %v1162
      %v1164 = vlaneseq
      %v1165 = vshrl.u32 %v1164, 7
      %v1166 = vsub.s32 %v1163, %v1165
      %v1167 = vrot.slane %v1153, %v1166
      %v1168 = vcombine.low %v1112, %v1144
      %v1169 = vcombine.high %v1112, %v1144
      %v1170 = vcombine.low %v1119, %v1151
      %v1171 = vcombine.high %v1119, %v1151
      %v1172 = vcombine.low %v1128, %v1160
      %v1173 = vcombine.high %v1128, %v1160
      %v1174 = vcombine.low %v1135, %v1167
      %v1175 = vcombine.high %v1135, %v1167
      %1177 = vrot.lane.b32.xlu0 %v856, 112
      %v1178 = vpop.permute.xlu0 %1177
      %1180 = vrot.lane.b32.xlu0 %v856, 96
      %v1181 = vpop.permute.xlu0 %1180
      %1183 = vrot.lane.b32.xlu0 %v856, 80
      %v1184 = vpop.permute.xlu0 %1183
      %1186 = vrot.lane.b32.xlu0 %v856, 64
      %v1187 = vpop.permute.xlu0 %1186
      %1189 = vrot.lane.b32.xlu0 %v856, 48
      %v1190 = vpop.permute.xlu0 %1189
      %1192 = vrot.lane.b32.xlu0 %v856, 32
      %v1193 = vpop.permute.xlu0 %1192
      %1195 = vrot.lane.b32.xlu0 %v856, 16
      %v1196 = vpop.permute.xlu0 %1195
      %1199 = vrot.lane.b32.xlu0 %v858, 112
      %v1200 = vpop.permute.xlu0 %1199
      %1202 = vrot.lane.b32.xlu0 %v858, 96
      %v1203 = vpop.permute.xlu0 %1202
      %1205 = vrot.lane.b32.xlu0 %v858, 80
      %v1206 = vpop.permute.xlu0 %1205
      %1208 = vrot.lane.b32.xlu0 %v858, 64
      %v1209 = vpop.permute.xlu0 %1208
      %1211 = vrot.lane.b32.xlu0 %v858, 48
      %v1212 = vpop.permute.xlu0 %1211
      %1214 = vrot.lane.b32.xlu0 %v858, 32
      %v1215 = vpop.permute.xlu0 %1214
      %1217 = vrot.lane.b32.xlu0 %v858, 16
      %v1218 = vpop.permute.xlu0 %1217
      %v1220 = vcombine.low %v856, %v1181
      %v1221 = vcombine.high %v856, %v1181
      %v1223 = vunpack.c.l.s4 1983009808
      %v1224 = vunpack.c.0.s8 %v1223
      %v1225 = vlaneseq
      %v1226 = vshrl.u32 %v1225, 7
      %v1227 = vsub.s32 %v1224, %v1226
      %v1228 = vrot.slane %v1220, %v1227
      %v1230 = vunpack.c.l.s4 1983009808
      %v1231 = vunpack.c.0.s8 %v1230
      %v1232 = vlaneseq
      %v1233 = vshrl.u32 %v1232, 7
      %v1234 = vsub.s32 %v1231, %v1233
      %v1235 = vrot.slane %v1221, %v1234
      %v1236 = vcombine.low %v1178, %v1184
      %v1237 = vcombine.high %v1178, %v1184
      %v1239 = vunpack.c.l.s4 1983009808
      %v1240 = vunpack.c.0.s8 %v1239
      %v1241 = vlaneseq
      %v1242 = vshrl.u32 %v1241, 7
      %v1243 = vsub.s32 %v1240, %v1242
      %v1244 = vrot.slane %v1236, %v1243
      %v1246 = vunpack.c.l.s4 1983009808
      %v1247 = vunpack.c.0.s8 %v1246
      %v1248 = vlaneseq
      %v1249 = vshrl.u32 %v1248, 7
      %v1250 = vsub.s32 %v1247, %v1249
      %v1251 = vrot.slane %v1237, %v1250
      %v1252 = vcombine.low %v1187, %v1193
      %v1253 = vcombine.high %v1187, %v1193
      %v1255 = vunpack.c.l.s4 1983009808
      %v1256 = vunpack.c.0.s8 %v1255
      %v1257 = vlaneseq
      %v1258 = vshrl.u32 %v1257, 7
      %v1259 = vsub.s32 %v1256, %v1258
      %v1260 = vrot.slane %v1252, %v1259
      %v1262 = vunpack.c.l.s4 1983009808
      %v1263 = vunpack.c.0.s8 %v1262
      %v1264 = vlaneseq
      %v1265 = vshrl.u32 %v1264, 7
      %v1266 = vsub.s32 %v1263, %v1265
      %v1267 = vrot.slane %v1253, %v1266
      %v1268 = vcombine.low %v1190, %v1196
      %v1269 = vcombine.high %v1190, %v1196
      %v1271 = vunpack.c.l.s4 1983009808
      %v1272 = vunpack.c.0.s8 %v1271
      %v1273 = vlaneseq
      %v1274 = vshrl.u32 %v1273, 7
      %v1275 = vsub.s32 %v1272, %v1274
      %v1276 = vrot.slane %v1268, %v1275
      %v1278 = vunpack.c.l.s4 1983009808
      %v1279 = vunpack.c.0.s8 %v1278
      %v1280 = vlaneseq
      %v1281 = vshrl.u32 %v1280, 7
      %v1282 = vsub.s32 %v1279, %v1281
      %v1283 = vrot.slane %v1269, %v1282
      %v1284 = vcombine.low %v1228, %v1244
      %v1285 = vcombine.high %v1228, %v1244
      %v1287 = vunpack.c.l.s4 1934713408
      %v1288 = vunpack.c.0.s8 %v1287
      %v1289 = vlaneseq
      %v1290 = vshrl.u32 %v1289, 7
      %v1291 = vsub.s32 %v1288, %v1290
      %v1292 = vrot.slane %v1284, %v1291
      %v1294 = vunpack.c.l.s4 1934713408
      %v1295 = vunpack.c.0.s8 %v1294
      %v1296 = vlaneseq
      %v1297 = vshrl.u32 %v1296, 7
      %v1298 = vsub.s32 %v1295, %v1297
      %v1299 = vrot.slane %v1285, %v1298
      %v1300 = vcombine.low %v1235, %v1251
      %v1301 = vcombine.high %v1235, %v1251
      %v1303 = vunpack.c.l.s4 1934713408
      %v1304 = vunpack.c.0.s8 %v1303
      %v1305 = vlaneseq
      %v1306 = vshrl.u32 %v1305, 7
      %v1307 = vsub.s32 %v1304, %v1306
      %v1308 = vrot.slane %v1300, %v1307
      %v1310 = vunpack.c.l.s4 1934713408
      %v1311 = vunpack.c.0.s8 %v1310
      %v1312 = vlaneseq
      %v1313 = vshrl.u32 %v1312, 7
      %v1314 = vsub.s32 %v1311, %v1313
      %v1315 = vrot.slane %v1301, %v1314
      %v1316 = vcombine.low %v1260, %v1276
      %v1317 = vcombine.high %v1260, %v1276
      %v1319 = vunpack.c.l.s4 1934713408
      %v1320 = vunpack.c.0.s8 %v1319
      %v1321 = vlaneseq
      %v1322 = vshrl.u32 %v1321, 7
      %v1323 = vsub.s32 %v1320, %v1322
      %v1324 = vrot.slane %v1316, %v1323
      %v1326 = vunpack.c.l.s4 1934713408
      %v1327 = vunpack.c.0.s8 %v1326
      %v1328 = vlaneseq
      %v1329 = vshrl.u32 %v1328, 7
      %v1330 = vsub.s32 %v1327, %v1329
      %v1331 = vrot.slane %v1317, %v1330
      %v1332 = vcombine.low %v1267, %v1283
      %v1333 = vcombine.high %v1267, %v1283
      %v1335 = vunpack.c.l.s4 1934713408
      %v1336 = vunpack.c.0.s8 %v1335
      %v1337 = vlaneseq
      %v1338 = vshrl.u32 %v1337, 7
      %v1339 = vsub.s32 %v1336, %v1338
      %v1340 = vrot.slane %v1332, %v1339
      %v1342 = vunpack.c.l.s4 1934713408
      %v1343 = vunpack.c.0.s8 %v1342
      %v1344 = vlaneseq
      %v1345 = vshrl.u32 %v1344, 7
      %v1346 = vsub.s32 %v1343, %v1345
      %v1347 = vrot.slane %v1333, %v1346
      %v1348 = vcombine.low %v1292, %v1324
      %v1349 = vcombine.high %v1292, %v1324
      %v1350 = vcombine.low %v1299, %v1331
      %v1351 = vcombine.high %v1299, %v1331
      %v1352 = vcombine.low %v1308, %v1340
      %v1353 = vcombine.high %v1308, %v1340
      %v1354 = vcombine.low %v1315, %v1347
      %v1355 = vcombine.high %v1315, %v1347
      %v1356 = vcombine.low %v858, %v1203
      %v1357 = vcombine.high %v858, %v1203
      %v1359 = vunpack.c.l.s4 1983009808
      %v1360 = vunpack.c.0.s8 %v1359
      %v1361 = vlaneseq
      %v1362 = vshrl.u32 %v1361, 7
      %v1363 = vsub.s32 %v1360, %v1362
      %v1364 = vrot.slane %v1356, %v1363
      %v1366 = vunpack.c.l.s4 1983009808
      %v1367 = vunpack.c.0.s8 %v1366
      %v1368 = vlaneseq
      %v1369 = vshrl.u32 %v1368, 7
      %v1370 = vsub.s32 %v1367, %v1369
      %v1371 = vrot.slane %v1357, %v1370
      %v1372 = vcombine.low %v1200, %v1206
      %v1373 = vcombine.high %v1200, %v1206
      %v1375 = vunpack.c.l.s4 1983009808
      %v1376 = vunpack.c.0.s8 %v1375
      %v1377 = vlaneseq
      %v1378 = vshrl.u32 %v1377, 7
      %v1379 = vsub.s32 %v1376, %v1378
      %v1380 = vrot.slane %v1372, %v1379
      %v1382 = vunpack.c.l.s4 1983009808
      %v1383 = vunpack.c.0.s8 %v1382
      %v1384 = vlaneseq
      %v1385 = vshrl.u32 %v1384, 7
      %v1386 = vsub.s32 %v1383, %v1385
      %v1387 = vrot.slane %v1373, %v1386
      %v1388 = vcombine.low %v1209, %v1215
      %v1389 = vcombine.high %v1209, %v1215
      %v1391 = vunpack.c.l.s4 1983009808
      %v1392 = vunpack.c.0.s8 %v1391
      %v1393 = vlaneseq
      %v1394 = vshrl.u32 %v1393, 7
      %v1395 = vsub.s32 %v1392, %v1394
      %v1396 = vrot.slane %v1388, %v1395
      %v1398 = vunpack.c.l.s4 1983009808
      %v1399 = vunpack.c.0.s8 %v1398
      %v1400 = vlaneseq
      %v1401 = vshrl.u32 %v1400, 7
      %v1402 = vsub.s32 %v1399, %v1401
      %v1403 = vrot.slane %v1389, %v1402
      %v1404 = vcombine.low %v1212, %v1218
      %v1405 = vcombine.high %v1212, %v1218
      %v1407 = vunpack.c.l.s4 1983009808
      %v1408 = vunpack.c.0.s8 %v1407
      %v1409 = vlaneseq
      %v1410 = vshrl.u32 %v1409, 7
      %v1411 = vsub.s32 %v1408, %v1410
      %v1412 = vrot.slane %v1404, %v1411
      %v1414 = vunpack.c.l.s4 1983009808
      %v1415 = vunpack.c.0.s8 %v1414
      %v1416 = vlaneseq
      %v1417 = vshrl.u32 %v1416, 7
      %v1418 = vsub.s32 %v1415, %v1417
      %v1419 = vrot.slane %v1405, %v1418
      %v1420 = vcombine.low %v1364, %v1380
      %v1421 = vcombine.high %v1364, %v1380
      %v1423 = vunpack.c.l.s4 1934713408
      %v1424 = vunpack.c.0.s8 %v1423
      %v1425 = vlaneseq
      %v1426 = vshrl.u32 %v1425, 7
      %v1427 = vsub.s32 %v1424, %v1426
      %v1428 = vrot.slane %v1420, %v1427
      %v1430 = vunpack.c.l.s4 1934713408
      %v1431 = vunpack.c.0.s8 %v1430
      %v1432 = vlaneseq
      %v1433 = vshrl.u32 %v1432, 7
      %v1434 = vsub.s32 %v1431, %v1433
      %v1435 = vrot.slane %v1421, %v1434
      %v1436 = vcombine.low %v1371, %v1387
      %v1437 = vcombine.high %v1371, %v1387
      %v1439 = vunpack.c.l.s4 1934713408
      %v1440 = vunpack.c.0.s8 %v1439
      %v1441 = vlaneseq
      %v1442 = vshrl.u32 %v1441, 7
      %v1443 = vsub.s32 %v1440, %v1442
      %v1444 = vrot.slane %v1436, %v1443
      %v1446 = vunpack.c.l.s4 1934713408
      %v1447 = vunpack.c.0.s8 %v1446
      %v1448 = vlaneseq
      %v1449 = vshrl.u32 %v1448, 7
      %v1450 = vsub.s32 %v1447, %v1449
      %v1451 = vrot.slane %v1437, %v1450
      %v1452 = vcombine.low %v1396, %v1412
      %v1453 = vcombine.high %v1396, %v1412
      %v1455 = vunpack.c.l.s4 1934713408
      %v1456 = vunpack.c.0.s8 %v1455
      %v1457 = vlaneseq
      %v1458 = vshrl.u32 %v1457, 7
      %v1459 = vsub.s32 %v1456, %v1458
      %v1460 = vrot.slane %v1452, %v1459
      %v1462 = vunpack.c.l.s4 1934713408
      %v1463 = vunpack.c.0.s8 %v1462
      %v1464 = vlaneseq
      %v1465 = vshrl.u32 %v1464, 7
      %v1466 = vsub.s32 %v1463, %v1465
      %v1467 = vrot.slane %v1453, %v1466
      %v1468 = vcombine.low %v1403, %v1419
      %v1469 = vcombine.high %v1403, %v1419
      %v1471 = vunpack.c.l.s4 1934713408
      %v1472 = vunpack.c.0.s8 %v1471
      %v1473 = vlaneseq
      %v1474 = vshrl.u32 %v1473, 7
      %v1475 = vsub.s32 %v1472, %v1474
      %v1476 = vrot.slane %v1468, %v1475
      %v1478 = vunpack.c.l.s4 1934713408
      %v1479 = vunpack.c.0.s8 %v1478
      %v1480 = vlaneseq
      %v1481 = vshrl.u32 %v1480, 7
      %v1482 = vsub.s32 %v1479, %v1481
      %v1483 = vrot.slane %v1469, %v1482
      %v1484 = vcombine.low %v1428, %v1460
      %v1485 = vcombine.high %v1428, %v1460
      %v1486 = vcombine.low %v1435, %v1467
      %v1487 = vcombine.high %v1435, %v1467
      %v1488 = vcombine.low %v1444, %v1476
      %v1489 = vcombine.high %v1444, %v1476
      %v1490 = vcombine.low %v1451, %v1483
      %v1491 = vcombine.high %v1451, %v1483
      %vm1492 = vcmask 130048
      %v1494 = vsel %vm1492, %v1032, 0
      %v1497 = vsel %vm1492, %v1168, 0
      %1499 = vmatprep.subr.mxu0 0.0
      %1500 = vmatpush1.msra.mxu0 %v1348
      %1501 = vmatprep.subr.mxu0 0.0
      %1502 = vmatpush1.msra.mxu0 %v1484
      %1503 = vmatprep.subr.mxu0 0.0
      %1504 = vmatpush1.msra.mxu0 0.0
      %1505 = vmatprep.subr.mxu0 0.0
      %1506 = vmatpush1.msra.mxu0 0.0
      %1507 = vmatprep.subr.mxu0 0.0
      %1508 = vmatpush1.msra.mxu0 0.0
      %1509 = vmatprep.subr.mxu0 0.0
      %1510 = vmatpush1.msra.mxu0 0.0
      %1511 = vmatprep.subr.mxu0 0.0
      %1512 = vmatpush1.msra.mxu0 0.0
      %1513 = vmatprep.subr.mxu0 0.0
      %1514 = vmatpush1.msra.mxu0 0.0
      %1515 = vmatprep.subr.mxu0 0.0
      %1516 = vmatpush1.msra.mxu0 0.0
      %1517 = vmatprep.subr.mxu0 0.0
      %1518 = vmatpush1.msra.mxu0 0.0
      %1519 = vmatprep.subr.mxu0 0.0
      %1520 = vmatpush1.msra.mxu0 0.0
      %1521 = vmatprep.subr.mxu0 0.0
      %1522 = vmatpush1.msra.mxu0 0.0
      %1523 = vmatprep.subr.mxu0 0.0
      %1524 = vmatpush1.msra.mxu0 0.0
      %1525 = vmatprep.subr.mxu0 0.0
      %1526 = vmatpush1.msra.mxu0 0.0
      %1527 = vmatprep.subr.mxu0 0.0
      %1528 = vmatpush1.msra.mxu0 0.0
      %1529 = vmatprep.subr.mxu0 0.0
      %1530 = vmatpush1.msra.mxu0 0.0
      %1531 = vmatprep.subr.mxu0 0.0
      %1532 = vmatpush1.msra.mxu0 0.0
      %1533 = vmatprep.subr.mxu0 0.0
      %1534 = vmatpush1.msra.mxu0 0.0
      %1535 = vmatprep.subr.mxu0 0.0
      %1536 = vmatpush1.msra.mxu0 0.0
      %1537 = vmatprep.subr.mxu0 0.0
      %1538 = vmatpush1.msra.mxu0 0.0
      %1539 = vmatprep.subr.mxu0 0.0
      %1540 = vmatpush1.msra.mxu0 0.0
      %1541 = vmatprep.subr.mxu0 0.0
      %1542 = vmatpush1.msra.mxu0 0.0
      %1543 = vmatprep.subr.mxu0 0.0
      %1544 = vmatpush1.msra.mxu0 0.0
      %1545 = vmatprep.subr.mxu0 0.0
      %1546 = vmatpush1.msra.mxu0 0.0
      %1547 = vmatprep.subr.mxu0 0.0
      %1548 = vmatpush1.msra.mxu0 0.0
      %1549 = vmatprep.subr.mxu0 0.0
      %1550 = vmatpush1.msra.mxu0 0.0
      %1551 = vmatprep.subr.mxu0 0.0
      %1552 = vmatpush1.msra.mxu0 0.0
      %1553 = vmatprep.subr.mxu0 0.0
      %1554 = vmatpush1.msra.mxu0 0.0
      %1555 = vmatprep.subr.mxu0 0.0
      %1556 = vmatpush1.msra.mxu0 0.0
      %1557 = vmatprep.subr.mxu0 0.0
      %1558 = vmatpush1.msra.mxu0 0.0
      %1559 = vmatprep.subr.mxu0 0.0
      %1560 = vmatpush1.msra.mxu0 0.0
      %1561 = vmatprep.subr.mxu0 0.0
      %1562 = vmatpush1.msra.mxu0 0.0
      %1563 = vmatprep.mubr.f32.mxu0 0.0
      %1564 = vmatmul.mubr.f32.gmra.mrb[0].mxu0 %v1494
      %v1565 = vpop.f32.mrb[0].mxu0
      %v1566 = vadd.f32 0.0, %v1565
      %v1567 = vpop.f32.mrb[0].mxu0
      %1568 = vmatprep.mubr.f32.mxu0 0.0
      %1569 = vmatmul.mubr.f32.gmra.mrb[0].mxu0 %v1497
      %v1570 = vpop.f32.mrb[0].mxu0
      %v1571 = vadd.f32 0.0, %v1570
      %v1572 = vpop.f32.mrb[0].mxu0
      %1573 = vdwg.mxu0
      %v1575 = vsel %vm1492, %v1033, 0
      %v1578 = vsel %vm1492, %v1169, 0
      %1580 = vmatprep.subr.mxu0 0.0
      %1581 = vmatpush1.msra.mxu0 %v1349
      %1582 = vmatprep.subr.mxu0 0.0
      %1583 = vmatpush1.msra.mxu0 %v1485
      %1584 = vmatprep.subr.mxu0 0.0
      %1585 = vmatpush1.msra.mxu0 0.0
      %1586 = vmatprep.subr.mxu0 0.0
      %1587 = vmatpush1.msra.mxu0 0.0
      %1588 = vmatprep.subr.mxu0 0.0
      %1589 = vmatpush1.msra.mxu0 0.0
      %1590 = vmatprep.subr.mxu0 0.0
      %1591 = vmatpush1.msra.mxu0 0.0
      %1592 = vmatprep.subr.mxu0 0.0
      %1593 = vmatpush1.msra.mxu0 0.0
      %1594 = vmatprep.subr.mxu0 0.0
      %1595 = vmatpush1.msra.mxu0 0.0
      %1596 = vmatprep.subr.mxu0 0.0
      %1597 = vmatpush1.msra.mxu0 0.0
      %1598 = vmatprep.subr.mxu0 0.0
      %1599 = vmatpush1.msra.mxu0 0.0
      %1600 = vmatprep.subr.mxu0 0.0
      %1601 = vmatpush1.msra.mxu0 0.0
      %1602 = vmatprep.subr.mxu0 0.0
      %1603 = vmatpush1.msra.mxu0 0.0
      %1604 = vmatprep.subr.mxu0 0.0
      %1605 = vmatpush1.msra.mxu0 0.0
      %1606 = vmatprep.subr.mxu0 0.0
      %1607 = vmatpush1.msra.mxu0 0.0
      %1608 = vmatprep.subr.mxu0 0.0
      %1609 = vmatpush1.msra.mxu0 0.0
      %1610 = vmatprep.subr.mxu0 0.0
      %1611 = vmatpush1.msra.mxu0 0.0
      %1612 = vmatprep.subr.mxu0 0.0
      %1613 = vmatpush1.msra.mxu0 0.0
      %1614 = vmatprep.subr.mxu0 0.0
      %1615 = vmatpush1.msra.mxu0 0.0
      %1616 = vmatprep.subr.mxu0 0.0
      %1617 = vmatpush1.msra.mxu0 0.0
      %1618 = vmatprep.subr.mxu0 0.0
      %1619 = vmatpush1.msra.mxu0 0.0
      %1620 = vmatprep.subr.mxu0 0.0
      %1621 = vmatpush1.msra.mxu0 0.0
      %1622 = vmatprep.subr.mxu0 0.0
      %1623 = vmatpush1.msra.mxu0 0.0
      %1624 = vmatprep.subr.mxu0 0.0
      %1625 = vmatpush1.msra.mxu0 0.0
      %1626 = vmatprep.subr.mxu0 0.0
      %1627 = vmatpush1.msra.mxu0 0.0
      %1628 = vmatprep.subr.mxu0 0.0
      %1629 = vmatpush1.msra.mxu0 0.0
      %1630 = vmatprep.subr.mxu0 0.0
      %1631 = vmatpush1.msra.mxu0 0.0
      %1632 = vmatprep.subr.mxu0 0.0
      %1633 = vmatpush1.msra.mxu0 0.0
      %1634 = vmatprep.subr.mxu0 0.0
      %1635 = vmatpush1.msra.mxu0 0.0
      %1636 = vmatprep.subr.mxu0 0.0
      %1637 = vmatpush1.msra.mxu0 0.0
      %1638 = vmatprep.subr.mxu0 0.0
      %1639 = vmatpush1.msra.mxu0 0.0
      %1640 = vmatprep.subr.mxu0 0.0
      %1641 = vmatpush1.msra.mxu0 0.0
      %1642 = vmatprep.subr.mxu0 0.0
      %1643 = vmatpush1.msra.mxu0 0.0
      %1644 = vmatprep.mubr.f32.mxu0 0.0
      %1645 = vmatmul.mubr.f32.gmra.mrb[0].mxu0 %v1575
      %v1646 = vpop.f32.mrb[0].mxu0
      %v1647 = vadd.f32 0.0, %v1646
      %v1648 = vpop.f32.mrb[0].mxu0
      %1649 = vmatprep.mubr.f32.mxu0 0.0
      %1650 = vmatmul.mubr.f32.gmra.mrb[0].mxu0 %v1578
      %v1651 = vpop.f32.mrb[0].mxu0
      %v1652 = vadd.f32 0.0, %v1651
      %v1653 = vpop.f32.mrb[0].mxu0
      %1654 = vdwg.mxu0
      %v1656 = vsel %vm1492, %v1034, 0
      %v1659 = vsel %vm1492, %v1170, 0
      %1661 = vmatprep.subr.mxu0 0.0
      %1662 = vmatpush1.msra.mxu0 %v1350
      %1663 = vmatprep.subr.mxu0 0.0
      %1664 = vmatpush1.msra.mxu0 %v1486
      %1665 = vmatprep.subr.mxu0 0.0
      %1666 = vmatpush1.msra.mxu0 0.0
      %1667 = vmatprep.subr.mxu0 0.0
      %1668 = vmatpush1.msra.mxu0 0.0
      %1669 = vmatprep.subr.mxu0 0.0
      %1670 = vmatpush1.msra.mxu0 0.0
      %1671 = vmatprep.subr.mxu0 0.0
      %1672 = vmatpush1.msra.mxu0 0.0
      %1673 = vmatprep.subr.mxu0 0.0
      %1674 = vmatpush1.msra.mxu0 0.0
      %1675 = vmatprep.subr.mxu0 0.0
      %1676 = vmatpush1.msra.mxu0 0.0
      %1677 = vmatprep.subr.mxu0 0.0
      %1678 = vmatpush1.msra.mxu0 0.0
      %1679 = vmatprep.subr.mxu0 0.0
      %1680 = vmatpush1.msra.mxu0 0.0
      %1681 = vmatprep.subr.mxu0 0.0
      %1682 = vmatpush1.msra.mxu0 0.0
      %1683 = vmatprep.subr.mxu0 0.0
      %1684 = vmatpush1.msra.mxu0 0.0
      %1685 = vmatprep.subr.mxu0 0.0
      %1686 = vmatpush1.msra.mxu0 0.0
      %1687 = vmatprep.subr.mxu0 0.0
      %1688 = vmatpush1.msra.mxu0 0.0
      %1689 = vmatprep.subr.mxu0 0.0
      %1690 = vmatpush1.msra.mxu0 0.0
      %1691 = vmatprep.subr.mxu0 0.0
      %1692 = vmatpush1.msra.mxu0 0.0
      %1693 = vmatprep.subr.mxu0 0.0
      %1694 = vmatpush1.msra.mxu0 0.0
      %1695 = vmatprep.subr.mxu0 0.0
      %1696 = vmatpush1.msra.mxu0 0.0
      %1697 = vmatprep.subr.mxu0 0.0
      %1698 = vmatpush1.msra.mxu0 0.0
      %1699 = vmatprep.subr.mxu0 0.0
      %1700 = vmatpush1.msra.mxu0 0.0
      %1701 = vmatprep.subr.mxu0 0.0
      %1702 = vmatpush1.msra.mxu0 0.0
      %1703 = vmatprep.subr.mxu0 0.0
      %1704 = vmatpush1.msra.mxu0 0.0
      %1705 = vmatprep.subr.mxu0 0.0
      %1706 = vmatpush1.msra.mxu0 0.0
      %1707 = vmatprep.subr.mxu0 0.0
      %1708 = vmatpush1.msra.mxu0 0.0
      %1709 = vmatprep.subr.mxu0 0.0
      %1710 = vmatpush1.msra.mxu0 0.0
      %1711 = vmatprep.subr.mxu0 0.0
      %1712 = vmatpush1.msra.mxu0 0.0
      %1713 = vmatprep.subr.mxu0 0.0
      %1714 = vmatpush1.msra.mxu0 0.0
      %1715 = vmatprep.subr.mxu0 0.0
      %1716 = vmatpush1.msra.mxu0 0.0
      %1717 = vmatprep.subr.mxu0 0.0
      %1718 = vmatpush1.msra.mxu0 0.0
      %1719 = vmatprep.subr.mxu0 0.0
      %1720 = vmatpush1.msra.mxu0 0.0
      %1721 = vmatprep.subr.mxu0 0.0
      %1722 = vmatpush1.msra.mxu0 0.0
      %1723 = vmatprep.subr.mxu0 0.0
      %1724 = vmatpush1.msra.mxu0 0.0
      %1725 = vmatprep.mubr.f32.mxu0 0.0
      %1726 = vmatmul.mubr.f32.gmra.mrb[0].mxu0 %v1656
      %v1727 = vpop.f32.mrb[0].mxu0
      %v1728 = vadd.f32 0.0, %v1727
      %v1729 = vpop.f32.mrb[0].mxu0
      %1730 = vmatprep.mubr.f32.mxu0 0.0
      %1731 = vmatmul.mubr.f32.gmra.mrb[0].mxu0 %v1659
      %v1732 = vpop.f32.mrb[0].mxu0
      %v1733 = vadd.f32 0.0, %v1732
      %v1734 = vpop.f32.mrb[0].mxu0
      %1735 = vdwg.mxu0
      %v1737 = vsel %vm1492, %v1035, 0
      %v1740 = vsel %vm1492, %v1171, 0
      %1742 = vmatprep.subr.mxu0 0.0
      %1743 = vmatpush1.msra.mxu0 %v1351
      %1744 = vmatprep.subr.mxu0 0.0
      %1745 = vmatpush1.msra.mxu0 %v1487
      %1746 = vmatprep.subr.mxu0 0.0
      %1747 = vmatpush1.msra.mxu0 0.0
      %1748 = vmatprep.subr.mxu0 0.0
      %1749 = vmatpush1.msra.mxu0 0.0
      %1750 = vmatprep.subr.mxu0 0.0
      %1751 = vmatpush1.msra.mxu0 0.0
      %1752 = vmatprep.subr.mxu0 0.0
      %1753 = vmatpush1.msra.mxu0 0.0
      %1754 = vmatprep.subr.mxu0 0.0
      %1755 = vmatpush1.msra.mxu0 0.0
      %1756 = vmatprep.subr.mxu0 0.0
      %1757 = vmatpush1.msra.mxu0 0.0
      %1758 = vmatprep.subr.mxu0 0.0
      %1759 = vmatpush1.msra.mxu0 0.0
      %1760 = vmatprep.subr.mxu0 0.0
      %1761 = vmatpush1.msra.mxu0 0.0
      %1762 = vmatprep.subr.mxu0 0.0
      %1763 = vmatpush1.msra.mxu0 0.0
      %1764 = vmatprep.subr.mxu0 0.0
      %1765 = vmatpush1.msra.mxu0 0.0
      %1766 = vmatprep.subr.mxu0 0.0
      %1767 = vmatpush1.msra.mxu0 0.0
      %1768 = vmatprep.subr.mxu0 0.0
      %1769 = vmatpush1.msra.mxu0 0.0
      %1770 = vmatprep.subr.mxu0 0.0
      %1771 = vmatpush1.msra.mxu0 0.0
      %1772 = vmatprep.subr.mxu0 0.0
      %1773 = vmatpush1.msra.mxu0 0.0
      %1774 = vmatprep.subr.mxu0 0.0
      %1775 = vmatpush1.msra.mxu0 0.0
      %1776 = vmatprep.subr.mxu0 0.0
      %1777 = vmatpush1.msra.mxu0 0.0
      %1778 = vmatprep.subr.mxu0 0.0
      %1779 = vmatpush1.msra.mxu0 0.0
      %1780 = vmatprep.subr.mxu0 0.0
      %1781 = vmatpush1.msra.mxu0 0.0
      %1782 = vmatprep.subr.mxu0 0.0
      %1783 = vmatpush1.msra.mxu0 0.0
      %1784 = vmatprep.subr.mxu0 0.0
      %1785 = vmatpush1.msra.mxu0 0.0
      %1786 = vmatprep.subr.mxu0 0.0
      %1787 = vmatpush1.msra.mxu0 0.0
      %1788 = vmatprep.subr.mxu0 0.0
      %1789 = vmatpush1.msra.mxu0 0.0
      %1790 = vmatprep.subr.mxu0 0.0
      %1791 = vmatpush1.msra.mxu0 0.0
      %1792 = vmatprep.subr.mxu0 0.0
      %1793 = vmatpush1.msra.mxu0 0.0
      %1794 = vmatprep.subr.mxu0 0.0
      %1795 = vmatpush1.msra.mxu0 0.0
      %1796 = vmatprep.subr.mxu0 0.0
      %1797 = vmatpush1.msra.mxu0 0.0
      %1798 = vmatprep.subr.mxu0 0.0
      %1799 = vmatpush1.msra.mxu0 0.0
      %1800 = vmatprep.subr.mxu0 0.0
      %1801 = vmatpush1.msra.mxu0 0.0
      %1802 = vmatprep.subr.mxu0 0.0
      %1803 = vmatpush1.msra.mxu0 0.0
      %1804 = vmatprep.subr.mxu0 0.0
      %1805 = vmatpush1.msra.mxu0 0.0
      %1806 = vmatprep.mubr.f32.mxu0 0.0
      %1807 = vmatmul.mubr.f32.gmra.mrb[0].mxu0 %v1737
      %v1808 = vpop.f32.mrb[0].mxu0
      %v1809 = vadd.f32 0.0, %v1808
      %v1810 = vpop.f32.mrb[0].mxu0
      %1811 = vmatprep.mubr.f32.mxu0 0.0
      %1812 = vmatmul.mubr.f32.gmra.mrb[0].mxu0 %v1740
      %v1813 = vpop.f32.mrb[0].mxu0
      %v1814 = vadd.f32 0.0, %v1813
      %v1815 = vpop.f32.mrb[0].mxu0
      %1816 = vdwg.mxu0
      %v1818 = vsel %vm1492, %v1036, 0
      %v1821 = vsel %vm1492, %v1172, 0
      %1823 = vmatprep.subr.mxu0 0.0
      %1824 = vmatpush1.msra.mxu0 %v1352
      %1825 = vmatprep.subr.mxu0 0.0
      %1826 = vmatpush1.msra.mxu0 %v1488
      %1827 = vmatprep.subr.mxu0 0.0
      %1828 = vmatpush1.msra.mxu0 0.0
      %1829 = vmatprep.subr.mxu0 0.0
      %1830 = vmatpush1.msra.mxu0 0.0
      %1831 = vmatprep.subr.mxu0 0.0
      %1832 = vmatpush1.msra.mxu0 0.0
      %1833 = vmatprep.subr.mxu0 0.0
      %1834 = vmatpush1.msra.mxu0 0.0
      %1835 = vmatprep.subr.mxu0 0.0
      %1836 = vmatpush1.msra.mxu0 0.0
      %1837 = vmatprep.subr.mxu0 0.0
      %1838 = vmatpush1.msra.mxu0 0.0
      %1839 = vmatprep.subr.mxu0 0.0
      %1840 = vmatpush1.msra.mxu0 0.0
      %1841 = vmatprep.subr.mxu0 0.0
      %1842 = vmatpush1.msra.mxu0 0.0
      %1843 = vmatprep.subr.mxu0 0.0
      %1844 = vmatpush1.msra.mxu0 0.0
      %1845 = vmatprep.subr.mxu0 0.0
      %1846 = vmatpush1.msra.mxu0 0.0
      %1847 = vmatprep.subr.mxu0 0.0
      %1848 = vmatpush1.msra.mxu0 0.0
      %1849 = vmatprep.subr.mxu0 0.0
      %1850 = vmatpush1.msra.mxu0 0.0
      %1851 = vmatprep.subr.mxu0 0.0
      %1852 = vmatpush1.msra.mxu0 0.0
      %1853 = vmatprep.subr.mxu0 0.0
      %1854 = vmatpush1.msra.mxu0 0.0
      %1855 = vmatprep.subr.mxu0 0.0
      %1856 = vmatpush1.msra.mxu0 0.0
      %1857 = vmatprep.subr.mxu0 0.0
      %1858 = vmatpush1.msra.mxu0 0.0
      %1859 = vmatprep.subr.mxu0 0.0
      %1860 = vmatpush1.msra.mxu0 0.0
      %1861 = vmatprep.subr.mxu0 0.0
      %1862 = vmatpush1.msra.mxu0 0.0
      %1863 = vmatprep.subr.mxu0 0.0
      %1864 = vmatpush1.msra.mxu0 0.0
      %1865 = vmatprep.subr.mxu0 0.0
      %1866 = vmatpush1.msra.mxu0 0.0
      %1867 = vmatprep.subr.mxu0 0.0
      %1868 = vmatpush1.msra.mxu0 0.0
      %1869 = vmatprep.subr.mxu0 0.0
      %1870 = vmatpush1.msra.mxu0 0.0
      %1871 = vmatprep.subr.mxu0 0.0
      %1872 = vmatpush1.msra.mxu0 0.0
      %1873 = vmatprep.subr.mxu0 0.0
      %1874 = vmatpush1.msra.mxu0 0.0
      %1875 = vmatprep.subr.mxu0 0.0
      %1876 = vmatpush1.msra.mxu0 0.0
      %1877 = vmatprep.subr.mxu0 0.0
      %1878 = vmatpush1.msra.mxu0 0.0
      %1879 = vmatprep.subr.mxu0 0.0
      %1880 = vmatpush1.msra.mxu0 0.0
      %1881 = vmatprep.subr.mxu0 0.0
      %1882 = vmatpush1.msra.mxu0 0.0
      %1883 = vmatprep.subr.mxu0 0.0
      %1884 = vmatpush1.msra.mxu0 0.0
      %1885 = vmatprep.subr.mxu0 0.0
      %1886 = vmatpush1.msra.mxu0 0.0
      %1887 = vmatprep.mubr.f32.mxu0 0.0
      %1888 = vmatmul.mubr.f32.gmra.mrb[0].mxu0 %v1818
      %v1889 = vpop.f32.mrb[0].mxu0
      %v1890 = vadd.f32 0.0, %v1889
      %v1891 = vpop.f32.mrb[0].mxu0
      %1892 = vmatprep.mubr.f32.mxu0 0.0
      %1893 = vmatmul.mubr.f32.gmra.mrb[0].mxu0 %v1821
      %v1894 = vpop.f32.mrb[0].mxu0
      %v1895 = vadd.f32 0.0, %v1894
      %v1896 = vpop.f32.mrb[0].mxu0
      %1897 = vdwg.mxu0
      %v1899 = vsel %vm1492, %v1037, 0
      %v1902 = vsel %vm1492, %v1173, 0
      %1904 = vmatprep.subr.mxu0 0.0
      %1905 = vmatpush1.msra.mxu0 %v1353
      %1906 = vmatprep.subr.mxu0 0.0
      %1907 = vmatpush1.msra.mxu0 %v1489
      %1908 = vmatprep.subr.mxu0 0.0
      %1909 = vmatpush1.msra.mxu0 0.0
      %1910 = vmatprep.subr.mxu0 0.0
      %1911 = vmatpush1.msra.mxu0 0.0
      %1912 = vmatprep.subr.mxu0 0.0
      %1913 = vmatpush1.msra.mxu0 0.0
      %1914 = vmatprep.subr.mxu0 0.0
      %1915 = vmatpush1.msra.mxu0 0.0
      %1916 = vmatprep.subr.mxu0 0.0
      %1917 = vmatpush1.msra.mxu0 0.0
      %1918 = vmatprep.subr.mxu0 0.0
      %1919 = vmatpush1.msra.mxu0 0.0
      %1920 = vmatprep.subr.mxu0 0.0
      %1921 = vmatpush1.msra.mxu0 0.0
      %1922 = vmatprep.subr.mxu0 0.0
      %1923 = vmatpush1.msra.mxu0 0.0
      %1924 = vmatprep.subr.mxu0 0.0
      %1925 = vmatpush1.msra.mxu0 0.0
      %1926 = vmatprep.subr.mxu0 0.0
      %1927 = vmatpush1.msra.mxu0 0.0
      %1928 = vmatprep.subr.mxu0 0.0
      %1929 = vmatpush1.msra.mxu0 0.0
      %1930 = vmatprep.subr.mxu0 0.0
      %1931 = vmatpush1.msra.mxu0 0.0
      %1932 = vmatprep.subr.mxu0 0.0
      %1933 = vmatpush1.msra.mxu0 0.0
      %1934 = vmatprep.subr.mxu0 0.0
      %1935 = vmatpush1.msra.mxu0 0.0
      %1936 = vmatprep.subr.mxu0 0.0
      %1937 = vmatpush1.msra.mxu0 0.0
      %1938 = vmatprep.subr.mxu0 0.0
      %1939 = vmatpush1.msra.mxu0 0.0
      %1940 = vmatprep.subr.mxu0 0.0
      %1941 = vmatpush1.msra.mxu0 0.0
      %1942 = vmatprep.subr.mxu0 0.0
      %1943 = vmatpush1.msra.mxu0 0.0
      %1944 = vmatprep.subr.mxu0 0.0
      %1945 = vmatpush1.msra.mxu0 0.0
      %1946 = vmatprep.subr.mxu0 0.0
      %1947 = vmatpush1.msra.mxu0 0.0
      %1948 = vmatprep.subr.mxu0 0.0
      %1949 = vmatpush1.msra.mxu0 0.0
      %1950 = vmatprep.subr.mxu0 0.0
      %1951 = vmatpush1.msra.mxu0 0.0
      %1952 = vmatprep.subr.mxu0 0.0
      %1953 = vmatpush1.msra.mxu0 0.0
      %1954 = vmatprep.subr.mxu0 0.0
      %1955 = vmatpush1.msra.mxu0 0.0
      %1956 = vmatprep.subr.mxu0 0.0
      %1957 = vmatpush1.msra.mxu0 0.0
      %1958 = vmatprep.subr.mxu0 0.0
      %1959 = vmatpush1.msra.mxu0 0.0
      %1960 = vmatprep.subr.mxu0 0.0
      %1961 = vmatpush1.msra.mxu0 0.0
      %1962 = vmatprep.subr.mxu0 0.0
      %1963 = vmatpush1.msra.mxu0 0.0
      %1964 = vmatprep.subr.mxu0 0.0
      %1965 = vmatpush1.msra.mxu0 0.0
      %1966 = vmatprep.subr.mxu0 0.0
      %1967 = vmatpush1.msra.mxu0 0.0
      %1968 = vmatprep.mubr.f32.mxu0 0.0
      %1969 = vmatmul.mubr.f32.gmra.mrb[0].mxu0 %v1899
      %v1970 = vpop.f32.mrb[0].mxu0
      %v1971 = vadd.f32 0.0, %v1970
      %v1972 = vpop.f32.mrb[0].mxu0
      %1973 = vmatprep.mubr.f32.mxu0 0.0
      %1974 = vmatmul.mubr.f32.gmra.mrb[0].mxu0 %v1902
      %v1975 = vpop.f32.mrb[0].mxu0
      %v1976 = vadd.f32 0.0, %v1975
      %v1977 = vpop.f32.mrb[0].mxu0
      %1978 = vdwg.mxu0
      %v1980 = vsel %vm1492, %v1038, 0
      %v1983 = vsel %vm1492, %v1174, 0
      %1985 = vmatprep.subr.mxu0 0.0
      %1986 = vmatpush1.msra.mxu0 %v1354
      %1987 = vmatprep.subr.mxu0 0.0
      %1988 = vmatpush1.msra.mxu0 %v1490
      %1989 = vmatprep.subr.mxu0 0.0
      %1990 = vmatpush1.msra.mxu0 0.0
      %1991 = vmatprep.subr.mxu0 0.0
      %1992 = vmatpush1.msra.mxu0 0.0
      %1993 = vmatprep.subr.mxu0 0.0
      %1994 = vmatpush1.msra.mxu0 0.0
      %1995 = vmatprep.subr.mxu0 0.0
      %1996 = vmatpush1.msra.mxu0 0.0
      %1997 = vmatprep.subr.mxu0 0.0
      %1998 = vmatpush1.msra.mxu0 0.0
      %1999 = vmatprep.subr.mxu0 0.0
      %2000 = vmatpush1.msra.mxu0 0.0
      %2001 = vmatprep.subr.mxu0 0.0
      %2002 = vmatpush1.msra.mxu0 0.0
      %2003 = vmatprep.subr.mxu0 0.0
      %2004 = vmatpush1.msra.mxu0 0.0
      %2005 = vmatprep.subr.mxu0 0.0
      %2006 = vmatpush1.msra.mxu0 0.0
      %2007 = vmatprep.subr.mxu0 0.0
      %2008 = vmatpush1.msra.mxu0 0.0
      %2009 = vmatprep.subr.mxu0 0.0
      %2010 = vmatpush1.msra.mxu0 0.0
      %2011 = vmatprep.subr.mxu0 0.0
      %2012 = vmatpush1.msra.mxu0 0.0
      %2013 = vmatprep.subr.mxu0 0.0
      %2014 = vmatpush1.msra.mxu0 0.0
      %2015 = vmatprep.subr.mxu0 0.0
      %2016 = vmatpush1.msra.mxu0 0.0
      %2017 = vmatprep.subr.mxu0 0.0
      %2018 = vmatpush1.msra.mxu0 0.0
      %2019 = vmatprep.subr.mxu0 0.0
      %2020 = vmatpush1.msra.mxu0 0.0
      %2021 = vmatprep.subr.mxu0 0.0
      %2022 = vmatpush1.msra.mxu0 0.0
      %2023 = vmatprep.subr.mxu0 0.0
      %2024 = vmatpush1.msra.mxu0 0.0
      %2025 = vmatprep.subr.mxu0 0.0
      %2026 = vmatpush1.msra.mxu0 0.0
      %2027 = vmatprep.subr.mxu0 0.0
      %2028 = vmatpush1.msra.mxu0 0.0
      %2029 = vmatprep.subr.mxu0 0.0
      %2030 = vmatpush1.msra.mxu0 0.0
      %2031 = vmatprep.subr.mxu0 0.0
      %2032 = vmatpush1.msra.mxu0 0.0
      %2033 = vmatprep.subr.mxu0 0.0
      %2034 = vmatpush1.msra.mxu0 0.0
      %2035 = vmatprep.subr.mxu0 0.0
      %2036 = vmatpush1.msra.mxu0 0.0
      %2037 = vmatprep.subr.mxu0 0.0
      %2038 = vmatpush1.msra.mxu0 0.0
      %2039 = vmatprep.subr.mxu0 0.0
      %2040 = vmatpush1.msra.mxu0 0.0
      %2041 = vmatprep.subr.mxu0 0.0
      %2042 = vmatpush1.msra.mxu0 0.0
      %2043 = vmatprep.subr.mxu0 0.0
      %2044 = vmatpush1.msra.mxu0 0.0
      %2045 = vmatprep.subr.mxu0 0.0
      %2046 = vmatpush1.msra.mxu0 0.0
      %2047 = vmatprep.subr.mxu0 0.0
      %2048 = vmatpush1.msra.mxu0 0.0
      %2049 = vmatprep.mubr.f32.mxu0 0.0
      %2050 = vmatmul.mubr.f32.gmra.mrb[0].mxu0 %v1980
      %v2051 = vpop.f32.mrb[0].mxu0
      %v2052 = vadd.f32 0.0, %v2051
      %v2053 = vpop.f32.mrb[0].mxu0
      %2054 = vmatprep.mubr.f32.mxu0 0.0
      %2055 = vmatmul.mubr.f32.gmra.mrb[0].mxu0 %v1983
      %v2056 = vpop.f32.mrb[0].mxu0
      %v2057 = vadd.f32 0.0, %v2056
      %v2058 = vpop.f32.mrb[0].mxu0
      %2059 = vdwg.mxu0
      %v2061 = vsel %vm1492, %v1039, 0
      %v2064 = vsel %vm1492, %v1175, 0
      %2066 = vmatprep.subr.mxu0 0.0
      %2067 = vmatpush1.msra.mxu0 %v1355
      %2068 = vmatprep.subr.mxu0 0.0
      %2069 = vmatpush1.msra.mxu0 %v1491
      %2070 = vmatprep.subr.mxu0 0.0
      %2071 = vmatpush1.msra.mxu0 0.0
      %2072 = vmatprep.subr.mxu0 0.0
      %2073 = vmatpush1.msra.mxu0 0.0
      %2074 = vmatprep.subr.mxu0 0.0
      %2075 = vmatpush1.msra.mxu0 0.0
      %2076 = vmatprep.subr.mxu0 0.0
      %2077 = vmatpush1.msra.mxu0 0.0
      %2078 = vmatprep.subr.mxu0 0.0
      %2079 = vmatpush1.msra.mxu0 0.0
      %2080 = vmatprep.subr.mxu0 0.0
      %2081 = vmatpush1.msra.mxu0 0.0
      %2082 = vmatprep.subr.mxu0 0.0
      %2083 = vmatpush1.msra.mxu0 0.0
      %2084 = vmatprep.subr.mxu0 0.0
      %2085 = vmatpush1.msra.mxu0 0.0
      %2086 = vmatprep.subr.mxu0 0.0
      %2087 = vmatpush1.msra.mxu0 0.0
      %2088 = vmatprep.subr.mxu0 0.0
      %2089 = vmatpush1.msra.mxu0 0.0
      %2090 = vmatprep.subr.mxu0 0.0
      %2091 = vmatpush1.msra.mxu0 0.0
      %2092 = vmatprep.subr.mxu0 0.0
      %2093 = vmatpush1.msra.mxu0 0.0
      %2094 = vmatprep.subr.mxu0 0.0
      %2095 = vmatpush1.msra.mxu0 0.0
      %2096 = vmatprep.subr.mxu0 0.0
      %2097 = vmatpush1.msra.mxu0 0.0
      %2098 = vmatprep.subr.mxu0 0.0
      %2099 = vmatpush1.msra.mxu0 0.0
      %2100 = vmatprep.subr.mxu0 0.0
      %2101 = vmatpush1.msra.mxu0 0.0
      %2102 = vmatprep.subr.mxu0 0.0
      %2103 = vmatpush1.msra.mxu0 0.0
      %2104 = vmatprep.subr.mxu0 0.0
      %2105 = vmatpush1.msra.mxu0 0.0
      %2106 = vmatprep.subr.mxu0 0.0
      %2107 = vmatpush1.msra.mxu0 0.0
      %2108 = vmatprep.subr.mxu0 0.0
      %2109 = vmatpush1.msra.mxu0 0.0
      %2110 = vmatprep.subr.mxu0 0.0
      %2111 = vmatpush1.msra.mxu0 0.0
      %2112 = vmatprep.subr.mxu0 0.0
      %2113 = vmatpush1.msra.mxu0 0.0
      %2114 = vmatprep.subr.mxu0 0.0
      %2115 = vmatpush1.msra.mxu0 0.0
      %2116 = vmatprep.subr.mxu0 0.0
      %2117 = vmatpush1.msra.mxu0 0.0
      %2118 = vmatprep.subr.mxu0 0.0
      %2119 = vmatpush1.msra.mxu0 0.0
      %2120 = vmatprep.subr.mxu0 0.0
      %2121 = vmatpush1.msra.mxu0 0.0
      %2122 = vmatprep.subr.mxu0 0.0
      %2123 = vmatpush1.msra.mxu0 0.0
      %2124 = vmatprep.subr.mxu0 0.0
      %2125 = vmatpush1.msra.mxu0 0.0
      %2126 = vmatprep.subr.mxu0 0.0
      %2127 = vmatpush1.msra.mxu0 0.0
      %2128 = vmatprep.subr.mxu0 0.0
      %2129 = vmatpush1.msra.mxu0 0.0
      %2130 = vmatprep.mubr.f32.mxu0 0.0
      %2131 = vmatmul.mubr.f32.gmra.mrb[0].mxu0 %v2061
      %v2132 = vpop.f32.mrb[0].mxu0
      %v2133 = vadd.f32 0.0, %v2132
      %v2134 = vpop.f32.mrb[0].mxu0
      %2135 = vmatprep.mubr.f32.mxu0 0.0
      %2136 = vmatmul.mubr.f32.gmra.mrb[0].mxu0 %v2064
      %v2137 = vpop.f32.mrb[0].mxu0
      %v2138 = vadd.f32 0.0, %v2137
      %v2139 = vpop.f32.mrb[0].mxu0
      %2140 = vdwg.mxu0
      %v2141 = vcombine.low %v1566, %v1728
      %v2142 = vcombine.high %v1566, %v1728
      %v2144 = vunpack.c.l.s4 1983009808
      %v2145 = vunpack.c.0.s8 %v2144
      %v2146 = vlaneseq
      %v2147 = vshrl.u32 %v2146, 7
      %v2148 = vsub.s32 %v2145, %v2147
      %v2149 = vrot.slane %v2141, %v2148
      %v2151 = vunpack.c.l.s4 1983009808
      %v2152 = vunpack.c.0.s8 %v2151
      %v2153 = vlaneseq
      %v2154 = vshrl.u32 %v2153, 7
      %v2155 = vsub.s32 %v2152, %v2154
      %v2156 = vrot.slane %v2142, %v2155
      %v2157 = vcombine.low %v1647, %v1809
      %v2158 = vcombine.high %v1647, %v1809
      %v2160 = vunpack.c.l.s4 1983009808
      %v2161 = vunpack.c.0.s8 %v2160
      %v2162 = vlaneseq
      %v2163 = vshrl.u32 %v2162, 7
      %v2164 = vsub.s32 %v2161, %v2163
      %v2165 = vrot.slane %v2157, %v2164
      %v2167 = vunpack.c.l.s4 1983009808
      %v2168 = vunpack.c.0.s8 %v2167
      %v2169 = vlaneseq
      %v2170 = vshrl.u32 %v2169, 7
      %v2171 = vsub.s32 %v2168, %v2170
      %v2172 = vrot.slane %v2158, %v2171
      %v2173 = vcombine.low %v1890, %v2052
      %v2174 = vcombine.high %v1890, %v2052
      %v2176 = vunpack.c.l.s4 1983009808
      %v2177 = vunpack.c.0.s8 %v2176
      %v2178 = vlaneseq
      %v2179 = vshrl.u32 %v2178, 7
      %v2180 = vsub.s32 %v2177, %v2179
      %v2181 = vrot.slane %v2173, %v2180
      %v2183 = vunpack.c.l.s4 1983009808
      %v2184 = vunpack.c.0.s8 %v2183
      %v2185 = vlaneseq
      %v2186 = vshrl.u32 %v2185, 7
      %v2187 = vsub.s32 %v2184, %v2186
      %v2188 = vrot.slane %v2174, %v2187
      %v2189 = vcombine.low %v1971, %v2133
      %v2190 = vcombine.high %v1971, %v2133
      %v2192 = vunpack.c.l.s4 1983009808
      %v2193 = vunpack.c.0.s8 %v2192
      %v2194 = vlaneseq
      %v2195 = vshrl.u32 %v2194, 7
      %v2196 = vsub.s32 %v2193, %v2195
      %v2197 = vrot.slane %v2189, %v2196
      %v2199 = vunpack.c.l.s4 1983009808
      %v2200 = vunpack.c.0.s8 %v2199
      %v2201 = vlaneseq
      %v2202 = vshrl.u32 %v2201, 7
      %v2203 = vsub.s32 %v2200, %v2202
      %v2204 = vrot.slane %v2190, %v2203
      %v2205 = vcombine.low %v2149, %v2165
      %v2206 = vcombine.high %v2149, %v2165
      %v2208 = vunpack.c.l.s4 1934713408
      %v2209 = vunpack.c.0.s8 %v2208
      %v2210 = vlaneseq
      %v2211 = vshrl.u32 %v2210, 7
      %v2212 = vsub.s32 %v2209, %v2211
      %v2213 = vrot.slane %v2205, %v2212
      %v2215 = vunpack.c.l.s4 1934713408
      %v2216 = vunpack.c.0.s8 %v2215
      %v2217 = vlaneseq
      %v2218 = vshrl.u32 %v2217, 7
      %v2219 = vsub.s32 %v2216, %v2218
      %v2220 = vrot.slane %v2206, %v2219
      %v2221 = vcombine.low %v2156, %v2172
      %v2222 = vcombine.high %v2156, %v2172
      %v2224 = vunpack.c.l.s4 1934713408
      %v2225 = vunpack.c.0.s8 %v2224
      %v2226 = vlaneseq
      %v2227 = vshrl.u32 %v2226, 7
      %v2228 = vsub.s32 %v2225, %v2227
      %v2229 = vrot.slane %v2221, %v2228
      %v2231 = vunpack.c.l.s4 1934713408
      %v2232 = vunpack.c.0.s8 %v2231
      %v2233 = vlaneseq
      %v2234 = vshrl.u32 %v2233, 7
      %v2235 = vsub.s32 %v2232, %v2234
      %v2236 = vrot.slane %v2222, %v2235
      %v2237 = vcombine.low %v2181, %v2197
      %v2238 = vcombine.high %v2181, %v2197
      %v2240 = vunpack.c.l.s4 1934713408
      %v2241 = vunpack.c.0.s8 %v2240
      %v2242 = vlaneseq
      %v2243 = vshrl.u32 %v2242, 7
      %v2244 = vsub.s32 %v2241, %v2243
      %v2245 = vrot.slane %v2237, %v2244
      %v2247 = vunpack.c.l.s4 1934713408
      %v2248 = vunpack.c.0.s8 %v2247
      %v2249 = vlaneseq
      %v2250 = vshrl.u32 %v2249, 7
      %v2251 = vsub.s32 %v2248, %v2250
      %v2252 = vrot.slane %v2238, %v2251
      %v2253 = vcombine.low %v2188, %v2204
      %v2254 = vcombine.high %v2188, %v2204
      %v2256 = vunpack.c.l.s4 1934713408
      %v2257 = vunpack.c.0.s8 %v2256
      %v2258 = vlaneseq
      %v2259 = vshrl.u32 %v2258, 7
      %v2260 = vsub.s32 %v2257, %v2259
      %v2261 = vrot.slane %v2253, %v2260
      %v2263 = vunpack.c.l.s4 1934713408
      %v2264 = vunpack.c.0.s8 %v2263
      %v2265 = vlaneseq
      %v2266 = vshrl.u32 %v2265, 7
      %v2267 = vsub.s32 %v2264, %v2266
      %v2268 = vrot.slane %v2254, %v2267
      %v2269 = vcombine.low %v2213, %v2245
      %v2270 = vcombine.high %v2213, %v2245
      %v2271 = vcombine.low %v2220, %v2252
      %v2272 = vcombine.high %v2220, %v2252
      %v2273 = vcombine.low %v2229, %v2261
      %v2274 = vcombine.high %v2229, %v2261
      %v2275 = vcombine.low %v2236, %v2268
      %v2276 = vcombine.high %v2236, %v2268
      %v2277 = vcombine.low %v1571, %v1733
      %v2278 = vcombine.high %v1571, %v1733
      %v2280 = vunpack.c.l.s4 1983009808
      %v2281 = vunpack.c.0.s8 %v2280
      %v2282 = vlaneseq
      %v2283 = vshrl.u32 %v2282, 7
      %v2284 = vsub.s32 %v2281, %v2283
      %v2285 = vrot.slane %v2277, %v2284
      %v2287 = vunpack.c.l.s4 1983009808
      %v2288 = vunpack.c.0.s8 %v2287
      %v2289 = vlaneseq
      %v2290 = vshrl.u32 %v2289, 7
      %v2291 = vsub.s32 %v2288, %v2290
      %v2292 = vrot.slane %v2278, %v2291
      %v2293 = vcombine.low %v1652, %v1814
      %v2294 = vcombine.high %v1652, %v1814
      %v2296 = vunpack.c.l.s4 1983009808
      %v2297 = vunpack.c.0.s8 %v2296
      %v2298 = vlaneseq
      %v2299 = vshrl.u32 %v2298, 7
      %v2300 = vsub.s32 %v2297, %v2299
      %v2301 = vrot.slane %v2293, %v2300
      %v2303 = vunpack.c.l.s4 1983009808
      %v2304 = vunpack.c.0.s8 %v2303
      %v2305 = vlaneseq
      %v2306 = vshrl.u32 %v2305, 7
      %v2307 = vsub.s32 %v2304, %v2306
      %v2308 = vrot.slane %v2294, %v2307
      %v2309 = vcombine.low %v1895, %v2057
      %v2310 = vcombine.high %v1895, %v2057
      %v2312 = vunpack.c.l.s4 1983009808
      %v2313 = vunpack.c.0.s8 %v2312
      %v2314 = vlaneseq
      %v2315 = vshrl.u32 %v2314, 7
      %v2316 = vsub.s32 %v2313, %v2315
      %v2317 = vrot.slane %v2309, %v2316
      %v2319 = vunpack.c.l.s4 1983009808
      %v2320 = vunpack.c.0.s8 %v2319
      %v2321 = vlaneseq
      %v2322 = vshrl.u32 %v2321, 7
      %v2323 = vsub.s32 %v2320, %v2322
      %v2324 = vrot.slane %v2310, %v2323
      %v2325 = vcombine.low %v1976, %v2138
      %v2326 = vcombine.high %v1976, %v2138
      %v2328 = vunpack.c.l.s4 1983009808
      %v2329 = vunpack.c.0.s8 %v2328
      %v2330 = vlaneseq
      %v2331 = vshrl.u32 %v2330, 7
      %v2332 = vsub.s32 %v2329, %v2331
      %v2333 = vrot.slane %v2325, %v2332
      %v2335 = vunpack.c.l.s4 1983009808
      %v2336 = vunpack.c.0.s8 %v2335
      %v2337 = vlaneseq
      %v2338 = vshrl.u32 %v2337, 7
      %v2339 = vsub.s32 %v2336, %v2338
      %v2340 = vrot.slane %v2326, %v2339
      %v2341 = vcombine.low %v2285, %v2301
      %v2342 = vcombine.high %v2285, %v2301
      %v2344 = vunpack.c.l.s4 1934713408
      %v2345 = vunpack.c.0.s8 %v2344
      %v2346 = vlaneseq
      %v2347 = vshrl.u32 %v2346, 7
      %v2348 = vsub.s32 %v2345, %v2347
      %v2349 = vrot.slane %v2341, %v2348
      %v2351 = vunpack.c.l.s4 1934713408
      %v2352 = vunpack.c.0.s8 %v2351
      %v2353 = vlaneseq
      %v2354 = vshrl.u32 %v2353, 7
      %v2355 = vsub.s32 %v2352, %v2354
      %v2356 = vrot.slane %v2342, %v2355
      %v2357 = vcombine.low %v2292, %v2308
      %v2358 = vcombine.high %v2292, %v2308
      %v2360 = vunpack.c.l.s4 1934713408
      %v2361 = vunpack.c.0.s8 %v2360
      %v2362 = vlaneseq
      %v2363 = vshrl.u32 %v2362, 7
      %v2364 = vsub.s32 %v2361, %v2363
      %v2365 = vrot.slane %v2357, %v2364
      %v2367 = vunpack.c.l.s4 1934713408
      %v2368 = vunpack.c.0.s8 %v2367
      %v2369 = vlaneseq
      %v2370 = vshrl.u32 %v2369, 7
      %v2371 = vsub.s32 %v2368, %v2370
      %v2372 = vrot.slane %v2358, %v2371
      %v2373 = vcombine.low %v2317, %v2333
      %v2374 = vcombine.high %v2317, %v2333
      %v2376 = vunpack.c.l.s4 1934713408
      %v2377 = vunpack.c.0.s8 %v2376
      %v2378 = vlaneseq
      %v2379 = vshrl.u32 %v2378, 7
      %v2380 = vsub.s32 %v2377, %v2379
      %v2381 = vrot.slane %v2373, %v2380
      %v2383 = vunpack.c.l.s4 1934713408
      %v2384 = vunpack.c.0.s8 %v2383
      %v2385 = vlaneseq
      %v2386 = vshrl.u32 %v2385, 7
      %v2387 = vsub.s32 %v2384, %v2386
      %v2388 = vrot.slane %v2374, %v2387
      %v2389 = vcombine.low %v2324, %v2340
      %v2390 = vcombine.high %v2324, %v2340
      %v2392 = vunpack.c.l.s4 1934713408
      %v2393 = vunpack.c.0.s8 %v2392
      %v2394 = vlaneseq
      %v2395 = vshrl.u32 %v2394, 7
      %v2396 = vsub.s32 %v2393, %v2395
      %v2397 = vrot.slane %v2389, %v2396
      %v2399 = vunpack.c.l.s4 1934713408
      %v2400 = vunpack.c.0.s8 %v2399
      %v2401 = vlaneseq
      %v2402 = vshrl.u32 %v2401, 7
      %v2403 = vsub.s32 %v2400, %v2402
      %v2404 = vrot.slane %v2390, %v2403
      %v2405 = vcombine.low %v2349, %v2381
      %v2406 = vcombine.high %v2349, %v2381
      %v2407 = vcombine.low %v2356, %v2388
      %v2408 = vcombine.high %v2356, %v2388
      %v2409 = vcombine.low %v2365, %v2397
      %v2410 = vcombine.high %v2365, %v2397
      %v2411 = vcombine.low %v2372, %v2404
      %v2412 = vcombine.high %v2372, %v2404
      %2414 = vrot.lane.b32.xlu0 %v2270, 16
      %v2415 = vpop.permute.xlu0 %2414
      %2418 = vrot.lane.b32.xlu0 %v2271, 32
      %v2419 = vpop.permute.xlu0 %2418
      %2422 = vrot.lane.b32.xlu0 %v2272, 48
      %v2423 = vpop.permute.xlu0 %2422
      %2426 = vrot.lane.b32.xlu0 %v2273, 64
      %v2427 = vpop.permute.xlu0 %2426
      %2430 = vrot.lane.b32.xlu0 %v2274, 80
      %v2431 = vpop.permute.xlu0 %2430
      %2434 = vrot.lane.b32.xlu0 %v2275, 96
      %v2435 = vpop.permute.xlu0 %2434
      %2438 = vrot.lane.b32.xlu0 %v2276, 112
      %v2439 = vpop.permute.xlu0 %2438
      %2442 = vrot.lane.b32.xlu0 %v2406, 16
      %v2443 = vpop.permute.xlu0 %2442
      %2446 = vrot.lane.b32.xlu0 %v2407, 32
      %v2447 = vpop.permute.xlu0 %2446
      %2450 = vrot.lane.b32.xlu0 %v2408, 48
      %v2451 = vpop.permute.xlu0 %2450
      %2454 = vrot.lane.b32.xlu0 %v2409, 64
      %v2455 = vpop.permute.xlu0 %2454
      %2458 = vrot.lane.b32.xlu0 %v2410, 80
      %v2459 = vpop.permute.xlu0 %2458
      %2462 = vrot.lane.b32.xlu0 %v2411, 96
      %v2463 = vpop.permute.xlu0 %2462
      %2466 = vrot.lane.b32.xlu0 %v2412, 112
      %v2467 = vpop.permute.xlu0 %2466
      %v2469 = vsel %vm1492, %v2269, %v2415
      %vm2470 = vcmask 261120
      %v2471 = vsel %vm2470, %v2469, %v2419
      %vm2472 = vcmask 392192
      %v2473 = vsel %vm2472, %v2471, %v2423
      %vm2474 = vcmask 523264
      %v2475 = vsel %vm2474, %v2473, %v2427
      %vm2476 = vcmask 654336
      %v2477 = vsel %vm2476, %v2475, %v2431
      %vm2478 = vcmask 785408
      %v2479 = vsel %vm2478, %v2477, %v2435
      %vm2480 = vcmask 916480
      %v2481 = vsel %vm2480, %v2479, %v2439
      %v2482 = vsel %vm1492, %v2405, %v2443
      %v2483 = vsel %vm2470, %v2482, %v2447
      %v2484 = vsel %vm2472, %v2483, %v2451
      %v2485 = vsel %vm2474, %v2484, %v2455
      %v2486 = vsel %vm2476, %v2485, %v2459
      %v2487 = vsel %vm2478, %v2486, %v2463
      %v2488 = vsel %vm2480, %v2487, %v2467
      %v2489 = vadd.f32 %v2481, %v2488
      %2490 = vadd.xlane.f32.xlu0 %v2489
      %v2491 = vpop.xlane.xlu0 %2490
      %v2492 = vrcp.pop 256.0
      %v2493 = vmul.f32 %v2491, %v2492
      %v2494 = vsub.f32 %v2481, %v2493
      %v2495 = vsub.f32 %v2488, %v2493
      %v2496 = vmul.f32 %v2494, %v2494
      %v2497 = vmul.f32 %v2495, %v2495
      %v2498 = vadd.f32 %v2496, %v2497
      %2499 = vadd.xlane.f32.xlu0 %v2498
      %v2500 = vpop.xlane.xlu0 %2499
      %v2501 = vmul.f32 %v2500, %v2492
      %v2502 = vadd.f32 %v2501, 1e-05
      %v2503 = vrsqrt.pop %v2502
      %v2504 = vmul.f32 %v2494, %v2503
      %v2505 = vmul.f32 %v2495, %v2503
      %v2506 = vld [vmem:[%s9] sm:$0xff]
      %v2507 = vld [vmem:[%s10] sm:$0xff]
      %v2508 = vld [vmem:[%s11] sm:$0xff]
      %v2510 = vsel %vm621, %v2507, 0
      %2512 = vmatprep.subr.mxu0 %v2505
      %2513 = vmatpush1.msra.mxu0 %v2504
      %2514 = vmatprep.subr.mxu0 0.0
      %2515 = vmatpush1.msra.mxu0 0.0
      %2516 = vmatprep.subr.mxu0 0.0
      %2517 = vmatpush1.msra.mxu0 0.0
      %2518 = vmatprep.subr.mxu0 0.0
      %2519 = vmatpush1.msra.mxu0 0.0
      %2520 = vmatprep.subr.mxu0 0.0
      %2521 = vmatpush1.msra.mxu0 0.0
      %2522 = vmatprep.subr.mxu0 0.0
      %2523 = vmatpush1.msra.mxu0 0.0
      %2524 = vmatprep.subr.mxu0 0.0
      %2525 = vmatpush1.msra.mxu0 0.0
      %2526 = vmatprep.subr.mxu0 0.0
      %2527 = vmatpush1.msra.mxu0 0.0
      %2528 = vmatprep.subr.mxu0 0.0
      %2529 = vmatpush1.msra.mxu0 0.0
      %2530 = vmatprep.subr.mxu0 0.0
      %2531 = vmatpush1.msra.mxu0 0.0
      %2532 = vmatprep.subr.mxu0 0.0
      %2533 = vmatpush1.msra.mxu0 0.0
      %2534 = vmatprep.subr.mxu0 0.0
      %2535 = vmatpush1.msra.mxu0 0.0
      %2536 = vmatprep.subr.mxu0 0.0
      %2537 = vmatpush1.msra.mxu0 0.0
      %2538 = vmatprep.subr.mxu0 0.0
      %2539 = vmatpush1.msra.mxu0 0.0
      %2540 = vmatprep.subr.mxu0 0.0
      %2541 = vmatpush1.msra.mxu0 0.0
      %2542 = vmatprep.subr.mxu0 0.0
      %2543 = vmatpush1.msra.mxu0 0.0
      %2544 = vmatprep.subr.mxu0 0.0
      %2545 = vmatpush1.msra.mxu0 0.0
      %2546 = vmatprep.subr.mxu0 0.0
      %2547 = vmatpush1.msra.mxu0 0.0
      %2548 = vmatprep.subr.mxu0 0.0
      %2549 = vmatpush1.msra.mxu0 0.0
      %2550 = vmatprep.subr.mxu0 0.0
      %2551 = vmatpush1.msra.mxu0 0.0
      %2552 = vmatprep.subr.mxu0 0.0
      %2553 = vmatpush1.msra.mxu0 0.0
      %2554 = vmatprep.subr.mxu0 0.0
      %2555 = vmatpush1.msra.mxu0 0.0
      %2556 = vmatprep.subr.mxu0 0.0
      %2557 = vmatpush1.msra.mxu0 0.0
      %2558 = vmatprep.subr.mxu0 0.0
      %2559 = vmatpush1.msra.mxu0 0.0
      %2560 = vmatprep.subr.mxu0 0.0
      %2561 = vmatpush1.msra.mxu0 0.0
      %2562 = vmatprep.subr.mxu0 0.0
      %2563 = vmatpush1.msra.mxu0 0.0
      %2564 = vmatprep.subr.mxu0 0.0
      %2565 = vmatpush1.msra.mxu0 0.0
      %2566 = vmatprep.subr.mxu0 0.0
      %2567 = vmatpush1.msra.mxu0 0.0
      %2568 = vmatprep.subr.mxu0 0.0
      %2569 = vmatpush1.msra.mxu0 0.0
      %2570 = vmatprep.subr.mxu0 0.0
      %2571 = vmatpush1.msra.mxu0 0.0
      %2572 = vmatprep.subr.mxu0 0.0
      %2573 = vmatpush1.msra.mxu0 0.0
      %2574 = vmatprep.subr.mxu0 0.0
      %2575 = vmatpush1.msra.mxu0 0.0
      %2576 = vmatprep.mubr.f32.mxu0 0.0
      %2577 = vmatmul.mubr.f32.gmra.mrb[0].mxu0 %v2510
      %v2578 = vpop.f32.mrb[0].mxu0
      %v2579 = vadd.f32 0.0, %v2578
      %v2580 = vpop.f32.mrb[0].mxu0
      %v2581 = vadd.f32 0.0, %v2580
      %2582 = vdwg.mxu0
      %v2584 = vsel %vm532, %v2506, 0
      %2586 = vmatprep.subr.mxu0 %v539
      %2587 = vmatpush1.msra.mxu0 %v537
      %2588 = vmatprep.subr.mxu0 0.0
      %2589 = vmatpush1.msra.mxu0 0.0
      %2590 = vmatprep.subr.mxu0 0.0
      %2591 = vmatpush1.msra.mxu0 0.0
      %2592 = vmatprep.subr.mxu0 0.0
      %2593 = vmatpush1.msra.mxu0 0.0
      %2594 = vmatprep.subr.mxu0 0.0
      %2595 = vmatpush1.msra.mxu0 0.0
      %2596 = vmatprep.subr.mxu0 0.0
      %2597 = vmatpush1.msra.mxu0 0.0
      %2598 = vmatprep.subr.mxu0 0.0
      %2599 = vmatpush1.msra.mxu0 0.0
      %2600 = vmatprep.subr.mxu0 0.0
      %2601 = vmatpush1.msra.mxu0 0.0
      %2602 = vmatprep.subr.mxu0 0.0
      %2603 = vmatpush1.msra.mxu0 0.0
      %2604 = vmatprep.subr.mxu0 0.0
      %2605 = vmatpush1.msra.mxu0 0.0
      %2606 = vmatprep.subr.mxu0 0.0
      %2607 = vmatpush1.msra.mxu0 0.0
      %2608 = vmatprep.subr.mxu0 0.0
      %2609 = vmatpush1.msra.mxu0 0.0
      %2610 = vmatprep.subr.mxu0 0.0
      %2611 = vmatpush1.msra.mxu0 0.0
      %2612 = vmatprep.subr.mxu0 0.0
      %2613 = vmatpush1.msra.mxu0 0.0
      %2614 = vmatprep.subr.mxu0 0.0
      %2615 = vmatpush1.msra.mxu0 0.0
      %2616 = vmatprep.subr.mxu0 0.0
      %2617 = vmatpush1.msra.mxu0 0.0
      %2618 = vmatprep.subr.mxu0 0.0
      %2619 = vmatpush1.msra.mxu0 0.0
      %2620 = vmatprep.subr.mxu0 0.0
      %2621 = vmatpush1.msra.mxu0 0.0
      %2622 = vmatprep.subr.mxu0 0.0
      %2623 = vmatpush1.msra.mxu0 0.0
      %2624 = vmatprep.subr.mxu0 0.0
      %2625 = vmatpush1.msra.mxu0 0.0
      %2626 = vmatprep.subr.mxu0 0.0
      %2627 = vmatpush1.msra.mxu0 0.0
      %2628 = vmatprep.subr.mxu0 0.0
      %2629 = vmatpush1.msra.mxu0 0.0
      %2630 = vmatprep.subr.mxu0 0.0
      %2631 = vmatpush1.msra.mxu0 0.0
      %2632 = vmatprep.subr.mxu0 0.0
      %2633 = vmatpush1.msra.mxu0 0.0
      %2634 = vmatprep.subr.mxu0 0.0
      %2635 = vmatpush1.msra.mxu0 0.0
      %2636 = vmatprep.subr.mxu0 0.0
      %2637 = vmatpush1.msra.mxu0 0.0
      %2638 = vmatprep.subr.mxu0 0.0
      %2639 = vmatpush1.msra.mxu0 0.0
      %2640 = vmatprep.subr.mxu0 0.0
      %2641 = vmatpush1.msra.mxu0 0.0
      %2642 = vmatprep.subr.mxu0 0.0
      %2643 = vmatpush1.msra.mxu0 0.0
      %2644 = vmatprep.subr.mxu0 0.0
      %2645 = vmatpush1.msra.mxu0 0.0
      %2646 = vmatprep.subr.mxu0 0.0
      %2647 = vmatpush1.msra.mxu0 0.0
      %2648 = vmatprep.subr.mxu0 0.0
      %2649 = vmatpush1.msra.mxu0 0.0
      %2650 = vmatprep.mubr.f32.mxu0 0.0
      %2651 = vmatmul.mubr.f32.gmra.mrb[0].mxu0 %v2584
      %v2652 = vpop.f32.mrb[0].mxu0
      %v2653 = vadd.f32 %v2579, %v2652
      %v2654 = vpop.f32.mrb[0].mxu0
      %v2655 = vadd.f32 %v2581, %v2654
      %2656 = vdwg.mxu0
      %2658 = vset.pattern.permute.xlu0 0
      %2659 = vperm.xlu0 %2658, %v2508
      %v2660 = vpop.permute.xlu0 %2659
      %v2662 = vadd.f32 %v2653, %v2660
      %v2663 = vadd.f32 %v2655, %v2660
      %v2664 = vmax.f32 %v2662, 0.0
      %v2665 = vmax.f32 %v2663, 0.0
      %v2666 = vld [vmem:[%s12] sm:$0xff]
      %v2667 = vld [vmem:[%s13] sm:$0xff]
      %2669 = vset.pattern.permute.xlu0 0
      %2670 = vperm.xlu0 %2669, %v2667
      %v2671 = vpop.permute.xlu0 %2670
      %v2674 = vsel %vm621, %v2666, 0
      %2676 = vmatprep.subr.mxu0 %v2665
      %2677 = vmatpush1.msra.mxu0 %v2664
      %2678 = vmatprep.subr.mxu0 0.0
      %2679 = vmatpush1.msra.mxu0 0.0
      %2680 = vmatprep.subr.mxu0 0.0
      %2681 = vmatpush1.msra.mxu0 0.0
      %2682 = vmatprep.subr.mxu0 0.0
      %2683 = vmatpush1.msra.mxu0 0.0
      %2684 = vmatprep.subr.mxu0 0.0
      %2685 = vmatpush1.msra.mxu0 0.0
      %2686 = vmatprep.subr.mxu0 0.0
      %2687 = vmatpush1.msra.mxu0 0.0
      %2688 = vmatprep.subr.mxu0 0.0
      %2689 = vmatpush1.msra.mxu0 0.0
      %2690 = vmatprep.subr.mxu0 0.0
      %2691 = vmatpush1.msra.mxu0 0.0
      %2692 = vmatprep.subr.mxu0 0.0
      %2693 = vmatpush1.msra.mxu0 0.0
      %2694 = vmatprep.subr.mxu0 0.0
      %2695 = vmatpush1.msra.mxu0 0.0
      %2696 = vmatprep.subr.mxu0 0.0
      %2697 = vmatpush1.msra.mxu0 0.0
      %2698 = vmatprep.subr.mxu0 0.0
      %2699 = vmatpush1.msra.mxu0 0.0
      %2700 = vmatprep.subr.mxu0 0.0
      %2701 = vmatpush1.msra.mxu0 0.0
      %2702 = vmatprep.subr.mxu0 0.0
      %2703 = vmatpush1.msra.mxu0 0.0
      %2704 = vmatprep.subr.mxu0 0.0
      %2705 = vmatpush1.msra.mxu0 0.0
      %2706 = vmatprep.subr.mxu0 0.0
      %2707 = vmatpush1.msra.mxu0 0.0
      %2708 = vmatprep.subr.mxu0 0.0
      %2709 = vmatpush1.msra.mxu0 0.0
      %2710 = vmatprep.subr.mxu0 0.0
      %2711 = vmatpush1.msra.mxu0 0.0
      %2712 = vmatprep.subr.mxu0 0.0
      %2713 = vmatpush1.msra.mxu0 0.0
      %2714 = vmatprep.subr.mxu0 0.0
      %2715 = vmatpush1.msra.mxu0 0.0
      %2716 = vmatprep.subr.mxu0 0.0
      %2717 = vmatpush1.msra.mxu0 0.0
      %2718 = vmatprep.subr.mxu0 0.0
      %2719 = vmatpush1.msra.mxu0 0.0
      %2720 = vmatprep.subr.mxu0 0.0
      %2721 = vmatpush1.msra.mxu0 0.0
      %2722 = vmatprep.subr.mxu0 0.0
      %2723 = vmatpush1.msra.mxu0 0.0
      %2724 = vmatprep.subr.mxu0 0.0
      %2725 = vmatpush1.msra.mxu0 0.0
      %2726 = vmatprep.subr.mxu0 0.0
      %2727 = vmatpush1.msra.mxu0 0.0
      %2728 = vmatprep.subr.mxu0 0.0
      %2729 = vmatpush1.msra.mxu0 0.0
      %2730 = vmatprep.subr.mxu0 0.0
      %2731 = vmatpush1.msra.mxu0 0.0
      %2732 = vmatprep.subr.mxu0 0.0
      %2733 = vmatpush1.msra.mxu0 0.0
      %2734 = vmatprep.subr.mxu0 0.0
      %2735 = vmatpush1.msra.mxu0 0.0
      %2736 = vmatprep.subr.mxu0 0.0
      %2737 = vmatpush1.msra.mxu0 0.0
      %2738 = vmatprep.subr.mxu0 0.0
      %2739 = vmatpush1.msra.mxu0 0.0
      %2740 = vmatprep.mubr.f32.mxu0 0.0
      %2741 = vmatmul.mubr.f32.gmra.mrb[0].mxu0 %v2674
      %v2742 = vpop.f32.mrb[0].mxu0
      %v2743 = vadd.f32 %v2671, %v2742
      %v2744 = vpop.f32.mrb[0].mxu0
      %v2745 = vadd.f32 %v2671, %v2744
      %2746 = vdwg.mxu0
      %v2747 = vld [vmem:[%s14] sm:$0xff]
      %v2748 = vld [vmem:[%s15] sm:$0xff]
      %2750 = vset.pattern.permute.xlu0 0
      %2751 = vperm.xlu0 %2750, %v2748
      %v2752 = vpop.permute.xlu0 %2751
      %v2755 = vsel %vm621, %v2747, 0
      %2757 = vmatprep.subr.mxu0 %v2745
      %2758 = vmatpush1.msra.mxu0 %v2743
      %2759 = vmatprep.subr.mxu0 0.0
      %2760 = vmatpush1.msra.mxu0 0.0
      %2761 = vmatprep.subr.mxu0 0.0
      %2762 = vmatpush1.msra.mxu0 0.0
      %2763 = vmatprep.subr.mxu0 0.0
      %2764 = vmatpush1.msra.mxu0 0.0
      %2765 = vmatprep.subr.mxu0 0.0
      %2766 = vmatpush1.msra.mxu0 0.0
      %2767 = vmatprep.subr.mxu0 0.0
      %2768 = vmatpush1.msra.mxu0 0.0
      %2769 = vmatprep.subr.mxu0 0.0
      %2770 = vmatpush1.msra.mxu0 0.0
      %2771 = vmatprep.subr.mxu0 0.0
      %2772 = vmatpush1.msra.mxu0 0.0
      %2773 = vmatprep.subr.mxu0 0.0
      %2774 = vmatpush1.msra.mxu0 0.0
      %2775 = vmatprep.subr.mxu0 0.0
      %2776 = vmatpush1.msra.mxu0 0.0
      %2777 = vmatprep.subr.mxu0 0.0
      %2778 = vmatpush1.msra.mxu0 0.0
      %2779 = vmatprep.subr.mxu0 0.0
      %2780 = vmatpush1.msra.mxu0 0.0
      %2781 = vmatprep.subr.mxu0 0.0
      %2782 = vmatpush1.msra.mxu0 0.0
      %2783 = vmatprep.subr.mxu0 0.0
      %2784 = vmatpush1.msra.mxu0 0.0
      %2785 = vmatprep.subr.mxu0 0.0
      %2786 = vmatpush1.msra.mxu0 0.0
      %2787 = vmatprep.subr.mxu0 0.0
      %2788 = vmatpush1.msra.mxu0 0.0
      %2789 = vmatprep.subr.mxu0 0.0
      %2790 = vmatpush1.msra.mxu0 0.0
      %2791 = vmatprep.subr.mxu0 0.0
      %2792 = vmatpush1.msra.mxu0 0.0
      %2793 = vmatprep.subr.mxu0 0.0
      %2794 = vmatpush1.msra.mxu0 0.0
      %2795 = vmatprep.subr.mxu0 0.0
      %2796 = vmatpush1.msra.mxu0 0.0
      %2797 = vmatprep.subr.mxu0 0.0
      %2798 = vmatpush1.msra.mxu0 0.0
      %2799 = vmatprep.subr.mxu0 0.0
      %2800 = vmatpush1.msra.mxu0 0.0
      %2801 = vmatprep.subr.mxu0 0.0
      %2802 = vmatpush1.msra.mxu0 0.0
      %2803 = vmatprep.subr.mxu0 0.0
      %2804 = vmatpush1.msra.mxu0 0.0
      %2805 = vmatprep.subr.mxu0 0.0
      %2806 = vmatpush1.msra.mxu0 0.0
      %2807 = vmatprep.subr.mxu0 0.0
      %2808 = vmatpush1.msra.mxu0 0.0
      %2809 = vmatprep.subr.mxu0 0.0
      %2810 = vmatpush1.msra.mxu0 0.0
      %2811 = vmatprep.subr.mxu0 0.0
      %2812 = vmatpush1.msra.mxu0 0.0
      %2813 = vmatprep.subr.mxu0 0.0
      %2814 = vmatpush1.msra.mxu0 0.0
      %2815 = vmatprep.subr.mxu0 0.0
      %2816 = vmatpush1.msra.mxu0 0.0
      %2817 = vmatprep.subr.mxu0 0.0
      %2818 = vmatpush1.msra.mxu0 0.0
      %2819 = vmatprep.subr.mxu0 0.0
      %2820 = vmatpush1.msra.mxu0 0.0
      %2821 = vmatprep.mubr.f32.mxu0 0.0
      %2822 = vmatmul.mubr.f32.gmra.mrb[0].mxu0 %v2755
      %v2823 = vpop.f32.mrb[0].mxu0
      %v2824 = vadd.f32 %v2752, %v2823
      %v2825 = vpop.f32.mrb[0].mxu0
      %v2826 = vadd.f32 %v2752, %v2825
      %2827 = vdwg.mxu0
      %v2828 = vadd.f32 %v2824, %v2826
      %2829 = vadd.xlane.f32.xlu0 %v2828
      %v2830 = vpop.xlane.xlu0 %2829
      %v2831 = vmul.f32 %v2830, %v2492
      %v2832 = vsub.f32 %v2824, %v2831
      %v2833 = vsub.f32 %v2826, %v2831
      %v2834 = vmul.f32 %v2832, %v2832
      %v2835 = vmul.f32 %v2833, %v2833
      %v2836 = vadd.f32 %v2834, %v2835
      %2837 = vadd.xlane.f32.xlu0 %v2836
      %v2838 = vpop.xlane.xlu0 %2837
      %v2839 = vmul.f32 %v2838, %v2492
      %v2840 = vadd.f32 %v2839, 1e-05
      %v2841 = vrsqrt.pop %v2840
      %v2842 = vmul.f32 %v2832, %v2841
      %v2843 = vmul.f32 %v2833, %v2841
      %2844 = vst [vmem:[%s521] sm:$0xff] %v2842
      %2845 = vst [vmem:[%s521 + $0x8] sm:$0xff] %v2843
      %p2846 = scmp.lt.s32.totalorder %s27, 1
      %s2847 = scalar_select %p2846, %s27, 1
      %s2848 = smul.addr %s2847, 2
      %s2849 = smul.addr %s2848, 8
      %s2850 = scalar_lea.vmem %s16, %s2849
      // Predicated region
      $region85: #{scaled_block_forward.1} parent=83 // pred_check
        %p2851 = pneg %p386
      $region86: #{scaled_block_forward.1} parent=83 // pred_check_branch
        %2853 = sbr.rel (%p2851) target = $region88
      $region87: #{scaled_block_forward.1} parent=83 // pred_region
        _
      $region88: #{scaled_block_forward.1} parent=83 // pred_fallthru
        _
    $region84: #{scaled_block_forward.1} parent=5 // pred_fallthru
      _
    %p2854 = scmp.le.s32.totalorder 2, %s22
    // Predicated region
    $region89: #{scaled_block_forward.1} parent=5 // pred_check
      %p2855 = pneg %p2854
    $region90: #{scaled_block_forward.1} parent=5 // pred_check_branch
      %2857 = sbr.rel (%p2855) target = $region92
    $region91: #{scaled_block_forward.1} parent=5 // pred_region
      %s2858 = ssub.s32 %s22, 2
      // Predicated region
      $region93: #{scaled_block_forward.1} parent=91 // pred_check
        %p2859 = pneg %p392
      $region94: #{scaled_block_forward.1} parent=91 // pred_check_branch
        %2861 = sbr.rel (%p2859) target = $region96
      $region95: #{scaled_block_forward.1} parent=91 // pred_region
        %p2862 = scmp.lt.s32.totalorder %s28, 1
        %s2863 = scalar_select %p2862, %s28, 1
        %s2864 = smul.addr %s2863, 2
        %s2865 = smul.addr %s2864, 8
        %s2866 = scalar_lea.vmem %s16, %s2865
      $region96: #{scaled_block_forward.1} parent=91 // pred_fallthru
        _
    $region92: #{scaled_block_forward.1} parent=5 // pred_fallthru
      _
  $region6: #{scaled_block_forward.1} parent=0 // loop_footer
    %s26 = sadd.s32 1, %s22
  $region7: #{scaled_block_forward.1} parent=0 // loop_footer_branch
    %21 = sbr.rel target = $region3
  $region8: #{scaled_block_forward.1} parent=0 // loop_exit
    _

</llo_original>
